<compile_context>
chip_gen: v7x
topology: tpu7x:2x2x1
jax: 0.10.0
libtpu: 0.0.40
codegen_flags: <defaults>
</compile_context>

<pallas_src>
import math
from functools import partial

import jax
import jax.numpy as jnp
from jax.experimental import pallas as pl
from jax.experimental.pallas import tpu as pltpu


def _span_classifier_kernel(H, L,
                            hid_ref, srch_ref, rule_ref, mvalid_ref, smask_ref, arow_ref,
                            wproj_ref, bproj_ref, wsp_ref, bsp_ref,
                            wq_st_ref, bq_st_ref, wq_ed_ref, bq_ed_ref,
                            wk_ref, bk_ref,
                            sts_ref, eds_ref):
    f32 = jnp.float32
    bf16 = jnp.bfloat16

    hid = hid_ref[0]            # (T, H)  bf16
    src_h = srch_ref[0]         # (S, H)  bf16
    rule = rule_ref[0]          # (S, H)  bf16
    mvalid = mvalid_ref[0]      # (S, L)  f32   step masks (sp_width > i)
    smask = smask_ref[0]        # (S, 1)  f32
    arow = arow_ref[0]          # (1, T)  f32

    S = src_h.shape[0]
    scale = 1.0 / math.sqrt(H)

    # ---- hoisted weight loads & bias broadcasts (not re-emitted per unrolled step) ----
    wproj = wproj_ref[...]                  # (2H, H) bf16
    bproj = bproj_ref[...]                  # (1, H)  f32
    wsp = wsp_ref[...]                      # (2H, H) bf16
    wq_st = wq_st_ref[...]                  # (H, H)  bf16
    wq_ed = wq_ed_ref[...]                  # (H, H)  bf16
    wk = wk_ref[...]                        # (H, 2H) bf16  == [wk_st | wk_ed]
    bk = bk_ref[...]                        # (1, 2H) f32
    bsp_full = jnp.broadcast_to(bsp_ref[...], (2 * S, H))
    bq_st_full = jnp.broadcast_to(bq_st_ref[...], (S, H))
    bq_ed_full = jnp.broadcast_to(bq_ed_ref[...], (S, H))

    # amask = logical_and(src_mask, attention_mask).float() -> (S, T)
    amask = smask * arow
    attn_d = jnp.sum(amask, axis=-1, keepdims=True)
    attn_d = jnp.where(attn_d == 0.0, 1.0, attn_d)       # masked_fill_(attn_d == 0, 1.0)
    attn_w0 = amask / attn_d

    # ---- loop-invariant key projections, st|ed fused into one MXU push ----
    k_both = jnp.dot(hid, wk, preferred_element_type=f32) + bk   # (T, 2H) f32
    k_st = k_both[:, :H].astype(bf16)                            # (T, H)
    k_ed = k_both[:, H:].astype(bf16)                            # (T, H)

    # src_hid = relu(src_rule_proj(cat(src_hid, rule_emb))) as a single (S,2H)x(2H,H)
    src_cat = jnp.concatenate([src_h, rule], axis=-1)            # (S, 2H) bf16
    src_proj = jnp.maximum(
        jnp.dot(src_cat, wproj, preferred_element_type=f32) + bproj, 0.0)   # (S, H) f32

    # st/ed heads stacked along M: rows [0:S] = start head, [S:2S] = end head.
    hid12 = jnp.concatenate([src_proj, src_proj], axis=0)        # (2S, H) f32
    attn12 = jnp.concatenate([attn_w0, attn_w0], axis=0)         # (2S, T) f32

    for i in range(L):                                           # static unroll
        mask3 = mvalid[:, i:i + 1] * amask                       # (S, T) f32

        # hidc for both heads with one matmul: (2S, T) @ (T, H)
        hidc12 = jnp.dot(attn12.astype(bf16), hid, preferred_element_type=f32)
        # sp_emb on cat(hid_prev, hidc): single (2S, 2H) @ (2H, H)
        cat12 = jnp.concatenate([hid12, hidc12], axis=-1).astype(bf16)
        hid12 = jnp.maximum(
            jnp.dot(cat12, wsp, preferred_element_type=f32) + bsp_full, 0.0)
        hid12_b = hid12.astype(bf16)

        q_st = jnp.dot(hid12_b[:S], wq_st, preferred_element_type=f32) + bq_st_full
        q_ed = jnp.dot(hid12_b[S:], wq_ed, preferred_element_type=f32) + bq_ed_full

        sc_st = jax.lax.dot_general(q_st.astype(bf16), k_st, (((1,), (1,)), ((), ())),
                                    preferred_element_type=f32) * scale      # (S, T)
        sc_ed = jax.lax.dot_general(q_ed.astype(bf16), k_ed, (((1,), (1,)), ((), ())),
                                    preferred_element_type=f32) * scale
        sc_st = jnp.where(mask3 > 0.0, sc_st, -1e18)
        sc_ed = jnp.where(mask3 > 0.0, sc_ed, -1e18)

        def _softmax(sc):
            m = jnp.max(sc, axis=-1, keepdims=True)
            e = jnp.exp(sc - m)
            return e * pl.reciprocal(jnp.sum(e, axis=-1, keepdims=True), approx=True)

        st = _softmax(sc_st)                                     # (S, T) f32
        ed = _softmax(sc_ed)
        attn12 = jnp.concatenate([st, ed], axis=0)               # carry to next step

        # write directly in (B, S, L, T) layout -> no post-kernel transpose
        sts_ref[0, :, i, :] = st
        eds_ref[0, :, i, :] = ed


def span_classifier_forward(hid, sp_width, max_sp_len, attention_mask,
                            src_hid, src_mask, rule_emb, params):
    B, T, H = hid.shape
    S = src_hid.shape[1]
    L = int(max_sp_len)
    f32 = jnp.float32
    bf16 = jnp.bfloat16

    # step masks computed on the JAX side (tiny lane dim -> keep it out of the kernel)
    masks = (sp_width[:, :, None] > jnp.arange(L)[None, None, :]).astype(f32)   # (B,S,L)
    smask_f = src_mask.astype(f32)[:, :, None]          # (B, S, 1)
    arow_f = attention_mask.astype(f32)[:, None, :]     # (B, 1, T)

    # bf16 matmul operands; biases stay f32 (added to f32 MXU accumulators)
    hid_b = hid.astype(bf16)
    srch_b = src_hid.astype(bf16)
    rule_b = rule_emb.astype(bf16)
    wk_both = jnp.concatenate([params["wk_st"], params["wk_ed"]], axis=1).astype(bf16)  # (H,2H)
    bk_both = jnp.concatenate([params["bk_st"], params["bk_ed"]], axis=1)               # (1,2H)

    per_b = lambda shape: pl.BlockSpec((1,) + shape, lambda b: (b,) + (0,) * len(shape))
    shared = lambda shape: pl.BlockSpec(shape, lambda b: (0,) * len(shape))

    in_specs = [
        per_b((T, H)),     # hid
        per_b((S, H)),     # src_hid
        per_b((S, H)),     # rule_emb
        per_b((S, L)),     # step masks
        per_b((S, 1)),     # src_mask
        per_b((1, T)),     # attention_mask
        shared((2 * H, H)), shared((1, H)),       # src_rule_proj
        shared((2 * H, H)), shared((1, H)),       # sp_emb
        shared((H, H)), shared((1, H)),           # span_st_attn query proj
        shared((H, H)), shared((1, H)),           # span_ed_attn query proj
        shared((H, 2 * H)), shared((1, 2 * H)),   # fused key proj [st|ed]
    ]
    out_specs = [
        pl.BlockSpec((1, S, L, T), lambda b: (b, 0, 0, 0)),
        pl.BlockSpec((1, S, L, T), lambda b: (b, 0, 0, 0)),
    ]
    out_shape = (
        jax.ShapeDtypeStruct((B, S, L, T), f32),
        jax.ShapeDtypeStruct((B, S, L, T), f32),
    )

    sts, eds = pl.pallas_call(
        partial(_span_classifier_kernel, H, L),
        out_shape=out_shape,
        grid_spec=pltpu.PrefetchScalarGridSpec(
            num_scalar_prefetch=0,
            grid=(B,),
            in_specs=in_specs,
            out_specs=out_specs,
        ),
        compiler_params=pltpu.CompilerParams(dimension_semantics=("parallel",)),
    )(hid_b, srch_b, rule_b, masks, smask_f, arow_f,
      params["w_proj"].astype(bf16), params["b_proj"],
      params["w_sp"].astype(bf16), params["b_sp"],
      params["wq_st"].astype(bf16), params["bq_st"],
      params["wq_ed"].astype(bf16), params["bq_ed"],
      wk_both, bk_both)

    return sts, eds, masks


def reference_forward(hid, sp_width, max_sp_len, attention_mask,
                      src_hid, src_mask, rule_emb, params):
    """Pure-JAX (f32) mirror of the PyTorch forward (eval mode)."""
    B, T, H = hid.shape
    L = int(max_sp_len)
    amask = src_mask[:, :, None] * attention_mask[:, None, :]
    attn_d = jnp.sum(amask, -1, keepdims=True)
    attn_d = jnp.where(attn_d == 0.0, 1.0, attn_d)
    attn_w0 = amask / attn_d

    src_proj = jax.nn.relu(
        jnp.concatenate([src_hid, rule_emb], -1) @ params["w_proj"] + params["b_proj"])

    def upd(attn_w, hidp):
        hidc = jnp.einsum("bst,bth->bsh", attn_w, hid)
        return jax.nn.relu(
            jnp.concatenate([hidp, hidc], -1) @ params["w_sp"] + params["b_sp"])

    def attend(query, wq, bq, wk, bk, mask3):
        q = query @ wq + bq
        k = hid @ wk + bk
        sc = jnp.einsum("bsh,bth->bst", q, k) / math.sqrt(H)
        sc = jnp.where(mask3 > 0.0, sc, -1e18)
        return jax.nn.softmax(sc, -1)

    hid1 = hid2 = src_proj
    st_prev = ed_prev = attn_w0
    sts, eds, masks = [], [], []
    for i in range(L):
        m = (sp_width > i).astype(jnp.float32)
        masks.append(m)
        mask3 = m[:, :, None] * amask
        hid1 = upd(st_prev, hid1)
        hid2 = upd(ed_prev, hid2)
        st_prev = attend(hid1, params["wq_st"], params["bq_st"],
                         params["wk_st"], params["bk_st"], mask3)
        ed_prev = attend(hid2, params["wq_ed"], params["bq_ed"],
                         params["wk_ed"], params["bk_ed"], mask3)
        sts.append(st_prev)
        eds.append(ed_prev)
    return jnp.stack(sts, -2), jnp.stack(eds, -2), jnp.stack(masks, -1)


def init_params(key, H):
    std = 0.02
    ks = jax.random.split(key, 6)
    lin = lambda k, din, dout: (jax.random.normal(k, (din, dout), jnp.float32) * std)
    zb = lambda: jnp.zeros((1, H), jnp.float32)
    return {
        "w_proj": lin(ks[0], 2 * H, H), "b_proj": zb(),
        "w_sp":   lin(ks[1], 2 * H, H), "b_sp":   zb(),
        "wq_st":  lin(ks[2], H, H),     "bq_st":  zb(),
        "wk_st":  lin(ks[3], H, H),     "bk_st":  zb(),
        "wq_ed":  lin(ks[4], H, H),     "bq_ed":  zb(),
        "wk_ed":  lin(ks[5], H, H),     "bk_ed":  zb(),
    }


if __name__ == "__main__":
    B, T, S, H, L = 2, 16, 8, 32, 3
    key = jax.random.PRNGKey(0)
    k1, k2, k3, k4, kp = jax.random.split(key, 5)

    hid = jax.random.normal(k1, (B, T, H), jnp.float32)
    src_hid = jax.random.normal(k2, (B, S, H), jnp.float32)
    rule_emb = jax.random.normal(k3, (B, S, H), jnp.float32)
    sp_width = jax.random.randint(k4, (B, S), 0, L + 1)
    attention_mask = (jnp.arange(T)[None, :] < jnp.array([T, T - 5])[:, None]).astype(jnp.float32)
    src_mask = (jnp.arange(S)[None, :] < jnp.array([S, S - 3])[:, None]).astype(jnp.float32)
    params = init_params(kp, H)

    sts, eds, masks = span_classifier_forward(
        hid, sp_width, L, attention_mask, src_hid, src_mask, rule_emb, params)
    jax.block_until_ready((sts, eds, masks))

    r_sts, r_eds, r_masks = reference_forward(
        hid, sp_width, L, attention_mask, src_hid, src_mask, rule_emb, params)

    assert sts.shape == (B, S, L, T) and eds.shape == (B, S, L, T) and masks.shape == (B, S, L)
    assert jnp.allclose(masks, r_masks)
    assert jnp.allclose(sts, r_sts, atol=2e-2, rtol=2e-2)
    assert jnp.allclose(eds, r_eds, atol=2e-2, rtol=2e-2)
    print("KERNEL_OK")
</pallas_src>

<mosaic_0001>
module attributes {stable_mosaic.version = 11 : i64} {
  func.func @_span_classifier_kernel(%arg0: i32, %arg1: memref<1x16x32xbf16, #tpu.memory_space<vmem>>, %arg2: memref<1x8x32xbf16, #tpu.memory_space<vmem>>, %arg3: memref<1x8x32xbf16, #tpu.memory_space<vmem>>, %arg4: memref<1x8x3xf32, #tpu.memory_space<vmem>>, %arg5: memref<1x8x1xf32, #tpu.memory_space<vmem>>, %arg6: memref<1x1x16xf32, #tpu.memory_space<vmem>>, %arg7: memref<64x32xbf16, #tpu.memory_space<vmem>>, %arg8: memref<1x32xf32, #tpu.memory_space<vmem>>, %arg9: memref<64x32xbf16, #tpu.memory_space<vmem>>, %arg10: memref<1x32xf32, #tpu.memory_space<vmem>>, %arg11: memref<32x32xbf16, #tpu.memory_space<vmem>>, %arg12: memref<1x32xf32, #tpu.memory_space<vmem>>, %arg13: memref<32x32xbf16, #tpu.memory_space<vmem>>, %arg14: memref<1x32xf32, #tpu.memory_space<vmem>>, %arg15: memref<32x64xbf16, #tpu.memory_space<vmem>>, %arg16: memref<1x64xf32, #tpu.memory_space<vmem>>, %arg17: memref<1x8x3x16xf32, #tpu.memory_space<vmem>>, %arg18: memref<1x8x3x16xf32, #tpu.memory_space<vmem>>) attributes {dimension_semantics = [#tpu.dimension_semantics<parallel>], iteration_bounds = array<i64: 2>, scalar_prefetch = 0 : i64, scratch_operands = 0 : i64, tpu.core_type = #tpu.core_type<tc>, window_params = [{transform_indices = @transform_0, window_bounds = array<i64: 1, 16, 32>}, {transform_indices = @transform_1, window_bounds = array<i64: 1, 8, 32>}, {transform_indices = @transform_2, window_bounds = array<i64: 1, 8, 32>}, {transform_indices = @transform_3, window_bounds = array<i64: 1, 8, 3>}, {transform_indices = @transform_4, window_bounds = array<i64: 1, 8, 1>}, {transform_indices = @transform_5, window_bounds = array<i64: 1, 1, 16>}, {pipeline_mode = #tpu.pipeline_mode<synchronous>, transform_indices = @transform_6, window_bounds = array<i64: 64, 32>}, {pipeline_mode = #tpu.pipeline_mode<synchronous>, transform_indices = @transform_7, window_bounds = array<i64: 1, 32>}, {pipeline_mode = #tpu.pipeline_mode<synchronous>, transform_indices = @transform_8, window_bounds = array<i64: 64, 32>}, {pipeline_mode = #tpu.pipeline_mode<synchronous>, transform_indices = @transform_9, window_bounds = array<i64: 1, 32>}, {pipeline_mode = #tpu.pipeline_mode<synchronous>, transform_indices = @transform_10, window_bounds = array<i64: 32, 32>}, {pipeline_mode = #tpu.pipeline_mode<synchronous>, transform_indices = @transform_11, window_bounds = array<i64: 1, 32>}, {pipeline_mode = #tpu.pipeline_mode<synchronous>, transform_indices = @transform_12, window_bounds = array<i64: 32, 32>}, {pipeline_mode = #tpu.pipeline_mode<synchronous>, transform_indices = @transform_13, window_bounds = array<i64: 1, 32>}, {pipeline_mode = #tpu.pipeline_mode<synchronous>, transform_indices = @transform_14, window_bounds = array<i64: 32, 64>}, {pipeline_mode = #tpu.pipeline_mode<synchronous>, transform_indices = @transform_15, window_bounds = array<i64: 1, 64>}, {transform_indices = @transform_16, window_bounds = array<i64: 1, 8, 3, 16>}, {transform_indices = @transform_17, window_bounds = array<i64: 1, 8, 3, 16>}]} {
    %c0 = arith.constant 0 : index
    %c0_0 = arith.constant 0 : index
    %c0_1 = arith.constant 0 : index
    %0 = vector.load %arg1[%c0, %c0_0, %c0_1] : memref<1x16x32xbf16, #tpu.memory_space<vmem>>, vector<1x16x32xbf16>
    %1 = vector.shape_cast %0 : vector<1x16x32xbf16> to vector<16x32xbf16>
    %c0_2 = arith.constant 0 : index
    %c0_3 = arith.constant 0 : index
    %c0_4 = arith.constant 0 : index
    %2 = vector.load %arg2[%c0_2, %c0_3, %c0_4] : memref<1x8x32xbf16, #tpu.memory_space<vmem>>, vector<1x8x32xbf16>
    %3 = vector.shape_cast %2 : vector<1x8x32xbf16> to vector<8x32xbf16>
    %c0_5 = arith.constant 0 : index
    %c0_6 = arith.constant 0 : index
    %c0_7 = arith.constant 0 : index
    %4 = vector.load %arg3[%c0_5, %c0_6, %c0_7] : memref<1x8x32xbf16, #tpu.memory_space<vmem>>, vector<1x8x32xbf16>
    %5 = vector.shape_cast %4 : vector<1x8x32xbf16> to vector<8x32xbf16>
    %c0_8 = arith.constant 0 : index
    %c0_9 = arith.constant 0 : index
    %c0_10 = arith.constant 0 : index
    %6 = vector.load %arg4[%c0_8, %c0_9, %c0_10] : memref<1x8x3xf32, #tpu.memory_space<vmem>>, vector<1x8x3xf32>
    %7 = vector.shape_cast %6 : vector<1x8x3xf32> to vector<8x3xf32>
    %c0_11 = arith.constant 0 : index
    %c0_12 = arith.constant 0 : index
    %c0_13 = arith.constant 0 : index
    %8 = vector.load %arg5[%c0_11, %c0_12, %c0_13] : memref<1x8x1xf32, #tpu.memory_space<vmem>>, vector<1x8x1xf32>
    %9 = vector.shape_cast %8 : vector<1x8x1xf32> to vector<8x1xf32>
    %c0_14 = arith.constant 0 : index
    %c0_15 = arith.constant 0 : index
    %c0_16 = arith.constant 0 : index
    %10 = vector.load %arg6[%c0_14, %c0_15, %c0_16] : memref<1x1x16xf32, #tpu.memory_space<vmem>>, vector<1x1x16xf32>
    %11 = vector.shape_cast %10 : vector<1x1x16xf32> to vector<1x16xf32>
    %c0_17 = arith.constant 0 : index
    %c0_18 = arith.constant 0 : index
    %12 = vector.load %arg7[%c0_17, %c0_18] : memref<64x32xbf16, #tpu.memory_space<vmem>>, vector<64x32xbf16>
    %c0_19 = arith.constant 0 : index
    %c0_20 = arith.constant 0 : index
    %13 = vector.load %arg8[%c0_19, %c0_20] : memref<1x32xf32, #tpu.memory_space<vmem>>, vector<1x32xf32>
    %c0_21 = arith.constant 0 : index
    %c0_22 = arith.constant 0 : index
    %14 = vector.load %arg9[%c0_21, %c0_22] : memref<64x32xbf16, #tpu.memory_space<vmem>>, vector<64x32xbf16>
    %c0_23 = arith.constant 0 : index
    %c0_24 = arith.constant 0 : index
    %15 = vector.load %arg11[%c0_23, %c0_24] : memref<32x32xbf16, #tpu.memory_space<vmem>>, vector<32x32xbf16>
    %c0_25 = arith.constant 0 : index
    %c0_26 = arith.constant 0 : index
    %16 = vector.load %arg13[%c0_25, %c0_26] : memref<32x32xbf16, #tpu.memory_space<vmem>>, vector<32x32xbf16>
    %c0_27 = arith.constant 0 : index
    %c0_28 = arith.constant 0 : index
    %17 = vector.load %arg15[%c0_27, %c0_28] : memref<32x64xbf16, #tpu.memory_space<vmem>>, vector<32x64xbf16>
    %c0_29 = arith.constant 0 : index
    %c0_30 = arith.constant 0 : index
    %18 = vector.load %arg16[%c0_29, %c0_30] : memref<1x64xf32, #tpu.memory_space<vmem>>, vector<1x64xf32>
    %c0_31 = arith.constant 0 : index
    %c0_32 = arith.constant 0 : index
    %19 = vector.load %arg10[%c0_31, %c0_32] : memref<1x32xf32, #tpu.memory_space<vmem>>, vector<1x32xf32>
    %20 = vector.shape_cast %19 : vector<1x32xf32> to vector<1x32xf32>
    %21 = vector.broadcast %20 : vector<1x32xf32> to vector<16x32xf32>
    %c0_33 = arith.constant 0 : index
    %c0_34 = arith.constant 0 : index
    %22 = vector.load %arg12[%c0_33, %c0_34] : memref<1x32xf32, #tpu.memory_space<vmem>>, vector<1x32xf32>
    %23 = vector.shape_cast %22 : vector<1x32xf32> to vector<1x32xf32>
    %24 = vector.broadcast %23 : vector<1x32xf32> to vector<8x32xf32>
    %c0_35 = arith.constant 0 : index
    %c0_36 = arith.constant 0 : index
    %25 = vector.load %arg14[%c0_35, %c0_36] : memref<1x32xf32, #tpu.memory_space<vmem>>, vector<1x32xf32>
    %26 = vector.shape_cast %25 : vector<1x32xf32> to vector<1x32xf32>
    %27 = vector.broadcast %26 : vector<1x32xf32> to vector<8x32xf32>
    %28 = vector.broadcast %9 : vector<8x1xf32> to vector<8x16xf32>
    %29 = vector.broadcast %11 : vector<1x16xf32> to vector<8x16xf32>
    %30 = arith.mulf %28, %29 : vector<8x16xf32>
    %cst = arith.constant dense<0.000000e+00> : vector<8xf32>
    %31 = vector.multi_reduction <add>, %30, %cst [1] : vector<8x16xf32> to vector<8xf32>
    %32 = vector.shape_cast %31 : vector<8xf32> to vector<8x1xf32>
    %cst_37 = arith.constant 0.000000e+00 : f32
    %33 = vector.broadcast %cst_37 : f32 to vector<8x1xf32>
    %34 = arith.cmpf oeq, %32, %33 : vector<8x1xf32>
    %cst_38 = arith.constant 1.000000e+00 : f32
    %35 = vector.broadcast %cst_38 : f32 to vector<8x1xf32>
    %36 = arith.select %34, %35, %32 : vector<8x1xi1>, vector<8x1xf32>
    %37 = vector.broadcast %36 : vector<8x1xf32> to vector<8x16xf32>
    %38 = arith.divf %30, %37 : vector<8x16xf32>
    %cst_39 = arith.constant dense<0.000000e+00> : vector<16x64xf32>
    %39 = tpu.matmul %1, %17, %cst_39 {dimension_numbers = #tpu.dot_dimension_numbers<[1], [0], [0], [1], [0, 0, 1, 1], [], []>} : vector<16x32xbf16>, vector<32x64xbf16>, vector<16x64xf32> -> vector<16x64xf32>
    %40 = vector.broadcast %18 : vector<1x64xf32> to vector<16x64xf32>
    %41 = arith.addf %39, %40 : vector<16x64xf32>
    %42 = vector.extract_strided_slice %41 {offsets = [0, 0], sizes = [16, 32], strides = [1, 1]} : vector<16x64xf32> to vector<16x32xf32>
    %43 = arith.truncf %42 : vector<16x32xf32> to vector<16x32xbf16>
    %44 = vector.extract_strided_slice %41 {offsets = [0, 32], sizes = [16, 32], strides = [1, 1]} : vector<16x64xf32> to vector<16x32xf32>
    %45 = arith.truncf %44 : vector<16x32xf32> to vector<16x32xbf16>
    %46 = tpu.concatenate %3, %5 in 1 : vector<8x32xbf16>, vector<8x32xbf16> -> vector<8x64xbf16>
    %cst_40 = arith.constant dense<0.000000e+00> : vector<8x32xf32>
    %47 = tpu.matmul %46, %12, %cst_40 {dimension_numbers = #tpu.dot_dimension_numbers<[1], [0], [0], [1], [0, 0, 1, 1], [], []>} : vector<8x64xbf16>, vector<64x32xbf16>, vector<8x32xf32> -> vector<8x32xf32>
    %48 = vector.broadcast %13 : vector<1x32xf32> to vector<8x32xf32>
    %49 = arith.addf %47, %48 : vector<8x32xf32>
    %cst_41 = arith.constant 0.000000e+00 : f32
    %50 = vector.broadcast %cst_41 : f32 to vector<8x32xf32>
    %51 = arith.maximumf %49, %50 : vector<8x32xf32>
    %52 = tpu.concatenate %51, %51 in 0 : vector<8x32xf32>, vector<8x32xf32> -> vector<16x32xf32>
    %53 = tpu.concatenate %38, %38 in 0 : vector<8x16xf32>, vector<8x16xf32> -> vector<16x16xf32>
    %54 = vector.extract_strided_slice %7 {offsets = [0, 0], sizes = [8, 1], strides = [1, 1]} : vector<8x3xf32> to vector<8x1xf32>
    %55 = vector.broadcast %54 : vector<8x1xf32> to vector<8x16xf32>
    %56 = arith.mulf %55, %30 : vector<8x16xf32>
    %57 = arith.truncf %53 : vector<16x16xf32> to vector<16x16xbf16>
    %cst_42 = arith.constant dense<0.000000e+00> : vector<16x32xf32>
    %58 = tpu.matmul %57, %1, %cst_42 {dimension_numbers = #tpu.dot_dimension_numbers<[1], [0], [0], [1], [0, 0, 1, 1], [], []>} : vector<16x16xbf16>, vector<16x32xbf16>, vector<16x32xf32> -> vector<16x32xf32>
    %59 = tpu.concatenate %52, %58 in 1 : vector<16x32xf32>, vector<16x32xf32> -> vector<16x64xf32>
    %60 = arith.truncf %59 : vector<16x64xf32> to vector<16x64xbf16>
    %cst_43 = arith.constant dense<0.000000e+00> : vector<16x32xf32>
    %61 = tpu.matmul %60, %14, %cst_43 {dimension_numbers = #tpu.dot_dimension_numbers<[1], [0], [0], [1], [0, 0, 1, 1], [], []>} : vector<16x64xbf16>, vector<64x32xbf16>, vector<16x32xf32> -> vector<16x32xf32>
    %62 = arith.addf %61, %21 : vector<16x32xf32>
    %cst_44 = arith.constant 0.000000e+00 : f32
    %63 = vector.broadcast %cst_44 : f32 to vector<16x32xf32>
    %64 = arith.maximumf %62, %63 : vector<16x32xf32>
    %65 = arith.truncf %64 : vector<16x32xf32> to vector<16x32xbf16>
    %66 = vector.extract_strided_slice %65 {offsets = [0, 0], sizes = [8, 32], strides = [1, 1]} : vector<16x32xbf16> to vector<8x32xbf16>
    %cst_45 = arith.constant dense<0.000000e+00> : vector<8x32xf32>
    %67 = tpu.matmul %66, %15, %cst_45 {dimension_numbers = #tpu.dot_dimension_numbers<[1], [0], [0], [1], [0, 0, 1, 1], [], []>} : vector<8x32xbf16>, vector<32x32xbf16>, vector<8x32xf32> -> vector<8x32xf32>
    %68 = arith.addf %67, %24 : vector<8x32xf32>
    %69 = vector.extract_strided_slice %65 {offsets = [8, 0], sizes = [8, 32], strides = [1, 1]} : vector<16x32xbf16> to vector<8x32xbf16>
    %cst_46 = arith.constant dense<0.000000e+00> : vector<8x32xf32>
    %70 = tpu.matmul %69, %16, %cst_46 {dimension_numbers = #tpu.dot_dimension_numbers<[1], [0], [0], [1], [0, 0, 1, 1], [], []>} : vector<8x32xbf16>, vector<32x32xbf16>, vector<8x32xf32> -> vector<8x32xf32>
    %71 = arith.addf %70, %27 : vector<8x32xf32>
    %72 = arith.truncf %68 : vector<8x32xf32> to vector<8x32xbf16>
    %cst_47 = arith.constant dense<0.000000e+00> : vector<8x16xf32>
    %73 = tpu.matmul %72, %43, %cst_47 {dimension_numbers = #tpu.dot_dimension_numbers<[1], [1], [0], [0], [0, 0, 1, 0], [], []>} : vector<8x32xbf16>, vector<16x32xbf16>, vector<8x16xf32> -> vector<8x16xf32>
    %cst_48 = arith.constant 0.176776692 : f32
    %74 = vector.broadcast %cst_48 : f32 to vector<8x16xf32>
    %75 = arith.mulf %73, %74 : vector<8x16xf32>
    %76 = arith.truncf %71 : vector<8x32xf32> to vector<8x32xbf16>
    %cst_49 = arith.constant dense<0.000000e+00> : vector<8x16xf32>
    %77 = tpu.matmul %76, %45, %cst_49 {dimension_numbers = #tpu.dot_dimension_numbers<[1], [1], [0], [0], [0, 0, 1, 0], [], []>} : vector<8x32xbf16>, vector<16x32xbf16>, vector<8x16xf32> -> vector<8x16xf32>
    %cst_50 = arith.constant 0.176776692 : f32
    %78 = vector.broadcast %cst_50 : f32 to vector<8x16xf32>
    %79 = arith.mulf %77, %78 : vector<8x16xf32>
    %cst_51 = arith.constant 0.000000e+00 : f32
    %80 = vector.broadcast %cst_51 : f32 to vector<8x16xf32>
    %81 = arith.cmpf ogt, %56, %80 : vector<8x16xf32>
    %cst_52 = arith.constant -9.99999984E+17 : f32
    %82 = vector.broadcast %cst_52 : f32 to vector<8x16xf32>
    %83 = arith.select %81, %75, %82 : vector<8x16xi1>, vector<8x16xf32>
    %cst_53 = arith.constant 0.000000e+00 : f32
    %84 = vector.broadcast %cst_53 : f32 to vector<8x16xf32>
    %85 = arith.cmpf ogt, %56, %84 : vector<8x16xf32>
    %cst_54 = arith.constant -9.99999984E+17 : f32
    %86 = vector.broadcast %cst_54 : f32 to vector<8x16xf32>
    %87 = arith.select %85, %79, %86 : vector<8x16xi1>, vector<8x16xf32>
    %cst_55 = arith.constant dense<0xFF800000> : vector<8xf32>
    %88 = vector.multi_reduction <maximumf>, %83, %cst_55 [1] : vector<8x16xf32> to vector<8xf32>
    %89 = vector.shape_cast %88 : vector<8xf32> to vector<8x1xf32>
    %90 = vector.broadcast %89 : vector<8x1xf32> to vector<8x16xf32>
    %91 = arith.subf %83, %90 : vector<8x16xf32>
    %92 = math.exp %91 : vector<8x16xf32>
    %cst_56 = arith.constant dense<0.000000e+00> : vector<8xf32>
    %93 = vector.multi_reduction <add>, %92, %cst_56 [1] : vector<8x16xf32> to vector<8xf32>
    %94 = vector.shape_cast %93 : vector<8xf32> to vector<8x1xf32>
    %95 = tpu.reciprocal %94 {approx = true} : vector<8x1xf32> -> vector<8x1xf32>
    %96 = vector.broadcast %95 : vector<8x1xf32> to vector<8x16xf32>
    %97 = arith.mulf %92, %96 : vector<8x16xf32>
    %cst_57 = arith.constant dense<0xFF800000> : vector<8xf32>
    %98 = vector.multi_reduction <maximumf>, %87, %cst_57 [1] : vector<8x16xf32> to vector<8xf32>
    %99 = vector.shape_cast %98 : vector<8xf32> to vector<8x1xf32>
    %100 = vector.broadcast %99 : vector<8x1xf32> to vector<8x16xf32>
    %101 = arith.subf %87, %100 : vector<8x16xf32>
    %102 = math.exp %101 : vector<8x16xf32>
    %cst_58 = arith.constant dense<0.000000e+00> : vector<8xf32>
    %103 = vector.multi_reduction <add>, %102, %cst_58 [1] : vector<8x16xf32> to vector<8xf32>
    %104 = vector.shape_cast %103 : vector<8xf32> to vector<8x1xf32>
    %105 = tpu.reciprocal %104 {approx = true} : vector<8x1xf32> -> vector<8x1xf32>
    %106 = vector.broadcast %105 : vector<8x1xf32> to vector<8x16xf32>
    %107 = arith.mulf %102, %106 : vector<8x16xf32>
    %108 = tpu.concatenate %97, %107 in 0 : vector<8x16xf32>, vector<8x16xf32> -> vector<16x16xf32>
    %c0_59 = arith.constant 0 : index
    %c0_60 = arith.constant 0 : index
    %c0_61 = arith.constant 0 : index
    %c0_62 = arith.constant 0 : index
    %109 = vector.load %arg17[%c0_59, %c0_60, %c0_61, %c0_62] : memref<1x8x3x16xf32, #tpu.memory_space<vmem>>, vector<1x8x1x16xf32>
    %110 = vector.shape_cast %109 : vector<1x8x1x16xf32> to vector<8x16xf32>
    %111 = vector.shape_cast %97 : vector<8x16xf32> to vector<1x8x1x16xf32>
    tpu.vector_store %arg17[%c0_59, %c0_60, %c0_61, %c0_62], %111 {strides = array<i32>} : memref<1x8x3x16xf32, #tpu.memory_space<vmem>>, vector<1x8x1x16xf32>,
    %c0_63 = arith.constant 0 : index
    %c0_64 = arith.constant 0 : index
    %c0_65 = arith.constant 0 : index
    %c0_66 = arith.constant 0 : index
    %112 = vector.load %arg18[%c0_63, %c0_64, %c0_65, %c0_66] : memref<1x8x3x16xf32, #tpu.memory_space<vmem>>, vector<1x8x1x16xf32>
    %113 = vector.shape_cast %112 : vector<1x8x1x16xf32> to vector<8x16xf32>
    %114 = vector.shape_cast %107 : vector<8x16xf32> to vector<1x8x1x16xf32>
    tpu.vector_store %arg18[%c0_63, %c0_64, %c0_65, %c0_66], %114 {strides = array<i32>} : memref<1x8x3x16xf32, #tpu.memory_space<vmem>>, vector<1x8x1x16xf32>,
    %115 = vector.extract_strided_slice %7 {offsets = [0, 1], sizes = [8, 1], strides = [1, 1]} : vector<8x3xf32> to vector<8x1xf32>
    %116 = vector.broadcast %115 : vector<8x1xf32> to vector<8x16xf32>
    %117 = arith.mulf %116, %30 : vector<8x16xf32>
    %118 = arith.truncf %108 : vector<16x16xf32> to vector<16x16xbf16>
    %cst_67 = arith.constant dense<0.000000e+00> : vector<16x32xf32>
    %119 = tpu.matmul %118, %1, %cst_67 {dimension_numbers = #tpu.dot_dimension_numbers<[1], [0], [0], [1], [0, 0, 1, 1], [], []>} : vector<16x16xbf16>, vector<16x32xbf16>, vector<16x32xf32> -> vector<16x32xf32>
    %120 = tpu.concatenate %64, %119 in 1 : vector<16x32xf32>, vector<16x32xf32> -> vector<16x64xf32>
    %121 = arith.truncf %120 : vector<16x64xf32> to vector<16x64xbf16>
    %cst_68 = arith.constant dense<0.000000e+00> : vector<16x32xf32>
    %122 = tpu.matmul %121, %14, %cst_68 {dimension_numbers = #tpu.dot_dimension_numbers<[1], [0], [0], [1], [0, 0, 1, 1], [], []>} : vector<16x64xbf16>, vector<64x32xbf16>, vector<16x32xf32> -> vector<16x32xf32>
    %123 = arith.addf %122, %21 : vector<16x32xf32>
    %cst_69 = arith.constant 0.000000e+00 : f32
    %124 = vector.broadcast %cst_69 : f32 to vector<16x32xf32>
    %125 = arith.maximumf %123, %124 : vector<16x32xf32>
    %126 = arith.truncf %125 : vector<16x32xf32> to vector<16x32xbf16>
    %127 = vector.extract_strided_slice %126 {offsets = [0, 0], sizes = [8, 32], strides = [1, 1]} : vector<16x32xbf16> to vector<8x32xbf16>
    %cst_70 = arith.constant dense<0.000000e+00> : vector<8x32xf32>
    %128 = tpu.matmul %127, %15, %cst_70 {dimension_numbers = #tpu.dot_dimension_numbers<[1], [0], [0], [1], [0, 0, 1, 1], [], []>} : vector<8x32xbf16>, vector<32x32xbf16>, vector<8x32xf32> -> vector<8x32xf32>
    %129 = arith.addf %128, %24 : vector<8x32xf32>
    %130 = vector.extract_strided_slice %126 {offsets = [8, 0], sizes = [8, 32], strides = [1, 1]} : vector<16x32xbf16> to vector<8x32xbf16>
    %cst_71 = arith.constant dense<0.000000e+00> : vector<8x32xf32>
    %131 = tpu.matmul %130, %16, %cst_71 {dimension_numbers = #tpu.dot_dimension_numbers<[1], [0], [0], [1], [0, 0, 1, 1], [], []>} : vector<8x32xbf16>, vector<32x32xbf16>, vector<8x32xf32> -> vector<8x32xf32>
    %132 = arith.addf %131, %27 : vector<8x32xf32>
    %133 = arith.truncf %129 : vector<8x32xf32> to vector<8x32xbf16>
    %cst_72 = arith.constant dense<0.000000e+00> : vector<8x16xf32>
    %134 = tpu.matmul %133, %43, %cst_72 {dimension_numbers = #tpu.dot_dimension_numbers<[1], [1], [0], [0], [0, 0, 1, 0], [], []>} : vector<8x32xbf16>, vector<16x32xbf16>, vector<8x16xf32> -> vector<8x16xf32>
    %cst_73 = arith.constant 0.176776692 : f32
    %135 = vector.broadcast %cst_73 : f32 to vector<8x16xf32>
    %136 = arith.mulf %134, %135 : vector<8x16xf32>
    %137 = arith.truncf %132 : vector<8x32xf32> to vector<8x32xbf16>
    %cst_74 = arith.constant dense<0.000000e+00> : vector<8x16xf32>
    %138 = tpu.matmul %137, %45, %cst_74 {dimension_numbers = #tpu.dot_dimension_numbers<[1], [1], [0], [0], [0, 0, 1, 0], [], []>} : vector<8x32xbf16>, vector<16x32xbf16>, vector<8x16xf32> -> vector<8x16xf32>
    %cst_75 = arith.constant 0.176776692 : f32
    %139 = vector.broadcast %cst_75 : f32 to vector<8x16xf32>
    %140 = arith.mulf %138, %139 : vector<8x16xf32>
    %cst_76 = arith.constant 0.000000e+00 : f32
    %141 = vector.broadcast %cst_76 : f32 to vector<8x16xf32>
    %142 = arith.cmpf ogt, %117, %141 : vector<8x16xf32>
    %cst_77 = arith.constant -9.99999984E+17 : f32
    %143 = vector.broadcast %cst_77 : f32 to vector<8x16xf32>
    %144 = arith.select %142, %136, %143 : vector<8x16xi1>, vector<8x16xf32>
    %cst_78 = arith.constant 0.000000e+00 : f32
    %145 = vector.broadcast %cst_78 : f32 to vector<8x16xf32>
    %146 = arith.cmpf ogt, %117, %145 : vector<8x16xf32>
    %cst_79 = arith.constant -9.99999984E+17 : f32
    %147 = vector.broadcast %cst_79 : f32 to vector<8x16xf32>
    %148 = arith.select %146, %140, %147 : vector<8x16xi1>, vector<8x16xf32>
    %cst_80 = arith.constant dense<0xFF800000> : vector<8xf32>
    %149 = vector.multi_reduction <maximumf>, %144, %cst_80 [1] : vector<8x16xf32> to vector<8xf32>
    %150 = vector.shape_cast %149 : vector<8xf32> to vector<8x1xf32>
    %151 = vector.broadcast %150 : vector<8x1xf32> to vector<8x16xf32>
    %152 = arith.subf %144, %151 : vector<8x16xf32>
    %153 = math.exp %152 : vector<8x16xf32>
    %cst_81 = arith.constant dense<0.000000e+00> : vector<8xf32>
    %154 = vector.multi_reduction <add>, %153, %cst_81 [1] : vector<8x16xf32> to vector<8xf32>
    %155 = vector.shape_cast %154 : vector<8xf32> to vector<8x1xf32>
    %156 = tpu.reciprocal %155 {approx = true} : vector<8x1xf32> -> vector<8x1xf32>
    %157 = vector.broadcast %156 : vector<8x1xf32> to vector<8x16xf32>
    %158 = arith.mulf %153, %157 : vector<8x16xf32>
    %cst_82 = arith.constant dense<0xFF800000> : vector<8xf32>
    %159 = vector.multi_reduction <maximumf>, %148, %cst_82 [1] : vector<8x16xf32> to vector<8xf32>
    %160 = vector.shape_cast %159 : vector<8xf32> to vector<8x1xf32>
    %161 = vector.broadcast %160 : vector<8x1xf32> to vector<8x16xf32>
    %162 = arith.subf %148, %161 : vector<8x16xf32>
    %163 = math.exp %162 : vector<8x16xf32>
    %cst_83 = arith.constant dense<0.000000e+00> : vector<8xf32>
    %164 = vector.multi_reduction <add>, %163, %cst_83 [1] : vector<8x16xf32> to vector<8xf32>
    %165 = vector.shape_cast %164 : vector<8xf32> to vector<8x1xf32>
    %166 = tpu.reciprocal %165 {approx = true} : vector<8x1xf32> -> vector<8x1xf32>
    %167 = vector.broadcast %166 : vector<8x1xf32> to vector<8x16xf32>
    %168 = arith.mulf %163, %167 : vector<8x16xf32>
    %169 = tpu.concatenate %158, %168 in 0 : vector<8x16xf32>, vector<8x16xf32> -> vector<16x16xf32>
    %c0_84 = arith.constant 0 : index
    %c0_85 = arith.constant 0 : index
    %c1 = arith.constant 1 : index
    %c0_86 = arith.constant 0 : index
    %170 = vector.load %arg17[%c0_84, %c0_85, %c1, %c0_86] : memref<1x8x3x16xf32, #tpu.memory_space<vmem>>, vector<1x8x1x16xf32>
    %171 = vector.shape_cast %170 : vector<1x8x1x16xf32> to vector<8x16xf32>
    %172 = vector.shape_cast %158 : vector<8x16xf32> to vector<1x8x1x16xf32>
    tpu.vector_store %arg17[%c0_84, %c0_85, %c1, %c0_86], %172 {strides = array<i32>} : memref<1x8x3x16xf32, #tpu.memory_space<vmem>>, vector<1x8x1x16xf32>,
    %c0_87 = arith.constant 0 : index
    %c0_88 = arith.constant 0 : index
    %c1_89 = arith.constant 1 : index
    %c0_90 = arith.constant 0 : index
    %173 = vector.load %arg18[%c0_87, %c0_88, %c1_89, %c0_90] : memref<1x8x3x16xf32, #tpu.memory_space<vmem>>, vector<1x8x1x16xf32>
    %174 = vector.shape_cast %173 : vector<1x8x1x16xf32> to vector<8x16xf32>
    %175 = vector.shape_cast %168 : vector<8x16xf32> to vector<1x8x1x16xf32>
    tpu.vector_store %arg18[%c0_87, %c0_88, %c1_89, %c0_90], %175 {strides = array<i32>} : memref<1x8x3x16xf32, #tpu.memory_space<vmem>>, vector<1x8x1x16xf32>,
    %176 = vector.extract_strided_slice %7 {offsets = [0, 2], sizes = [8, 1], strides = [1, 1]} : vector<8x3xf32> to vector<8x1xf32>
    %177 = vector.broadcast %176 : vector<8x1xf32> to vector<8x16xf32>
    %178 = arith.mulf %177, %30 : vector<8x16xf32>
    %179 = arith.truncf %169 : vector<16x16xf32> to vector<16x16xbf16>
    %cst_91 = arith.constant dense<0.000000e+00> : vector<16x32xf32>
    %180 = tpu.matmul %179, %1, %cst_91 {dimension_numbers = #tpu.dot_dimension_numbers<[1], [0], [0], [1], [0, 0, 1, 1], [], []>} : vector<16x16xbf16>, vector<16x32xbf16>, vector<16x32xf32> -> vector<16x32xf32>
    %181 = tpu.concatenate %125, %180 in 1 : vector<16x32xf32>, vector<16x32xf32> -> vector<16x64xf32>
    %182 = arith.truncf %181 : vector<16x64xf32> to vector<16x64xbf16>
    %cst_92 = arith.constant dense<0.000000e+00> : vector<16x32xf32>
    %183 = tpu.matmul %182, %14, %cst_92 {dimension_numbers = #tpu.dot_dimension_numbers<[1], [0], [0], [1], [0, 0, 1, 1], [], []>} : vector<16x64xbf16>, vector<64x32xbf16>, vector<16x32xf32> -> vector<16x32xf32>
    %184 = arith.addf %183, %21 : vector<16x32xf32>
    %cst_93 = arith.constant 0.000000e+00 : f32
    %185 = vector.broadcast %cst_93 : f32 to vector<16x32xf32>
    %186 = arith.maximumf %184, %185 : vector<16x32xf32>
    %187 = arith.truncf %186 : vector<16x32xf32> to vector<16x32xbf16>
    %188 = vector.extract_strided_slice %187 {offsets = [0, 0], sizes = [8, 32], strides = [1, 1]} : vector<16x32xbf16> to vector<8x32xbf16>
    %cst_94 = arith.constant dense<0.000000e+00> : vector<8x32xf32>
    %189 = tpu.matmul %188, %15, %cst_94 {dimension_numbers = #tpu.dot_dimension_numbers<[1], [0], [0], [1], [0, 0, 1, 1], [], []>} : vector<8x32xbf16>, vector<32x32xbf16>, vector<8x32xf32> -> vector<8x32xf32>
    %190 = arith.addf %189, %24 : vector<8x32xf32>
    %191 = vector.extract_strided_slice %187 {offsets = [8, 0], sizes = [8, 32], strides = [1, 1]} : vector<16x32xbf16> to vector<8x32xbf16>
    %cst_95 = arith.constant dense<0.000000e+00> : vector<8x32xf32>
    %192 = tpu.matmul %191, %16, %cst_95 {dimension_numbers = #tpu.dot_dimension_numbers<[1], [0], [0], [1], [0, 0, 1, 1], [], []>} : vector<8x32xbf16>, vector<32x32xbf16>, vector<8x32xf32> -> vector<8x32xf32>
    %193 = arith.addf %192, %27 : vector<8x32xf32>
    %194 = arith.truncf %190 : vector<8x32xf32> to vector<8x32xbf16>
    %cst_96 = arith.constant dense<0.000000e+00> : vector<8x16xf32>
    %195 = tpu.matmul %194, %43, %cst_96 {dimension_numbers = #tpu.dot_dimension_numbers<[1], [1], [0], [0], [0, 0, 1, 0], [], []>} : vector<8x32xbf16>, vector<16x32xbf16>, vector<8x16xf32> -> vector<8x16xf32>
    %cst_97 = arith.constant 0.176776692 : f32
    %196 = vector.broadcast %cst_97 : f32 to vector<8x16xf32>
    %197 = arith.mulf %195, %196 : vector<8x16xf32>
    %198 = arith.truncf %193 : vector<8x32xf32> to vector<8x32xbf16>
    %cst_98 = arith.constant dense<0.000000e+00> : vector<8x16xf32>
    %199 = tpu.matmul %198, %45, %cst_98 {dimension_numbers = #tpu.dot_dimension_numbers<[1], [1], [0], [0], [0, 0, 1, 0], [], []>} : vector<8x32xbf16>, vector<16x32xbf16>, vector<8x16xf32> -> vector<8x16xf32>
    %cst_99 = arith.constant 0.176776692 : f32
    %200 = vector.broadcast %cst_99 : f32 to vector<8x16xf32>
    %201 = arith.mulf %199, %200 : vector<8x16xf32>
    %cst_100 = arith.constant 0.000000e+00 : f32
    %202 = vector.broadcast %cst_100 : f32 to vector<8x16xf32>
    %203 = arith.cmpf ogt, %178, %202 : vector<8x16xf32>
    %cst_101 = arith.constant -9.99999984E+17 : f32
    %204 = vector.broadcast %cst_101 : f32 to vector<8x16xf32>
    %205 = arith.select %203, %197, %204 : vector<8x16xi1>, vector<8x16xf32>
    %cst_102 = arith.constant 0.000000e+00 : f32
    %206 = vector.broadcast %cst_102 : f32 to vector<8x16xf32>
    %207 = arith.cmpf ogt, %178, %206 : vector<8x16xf32>
    %cst_103 = arith.constant -9.99999984E+17 : f32
    %208 = vector.broadcast %cst_103 : f32 to vector<8x16xf32>
    %209 = arith.select %207, %201, %208 : vector<8x16xi1>, vector<8x16xf32>
    %cst_104 = arith.constant dense<0xFF800000> : vector<8xf32>
    %210 = vector.multi_reduction <maximumf>, %205, %cst_104 [1] : vector<8x16xf32> to vector<8xf32>
    %211 = vector.shape_cast %210 : vector<8xf32> to vector<8x1xf32>
    %212 = vector.broadcast %211 : vector<8x1xf32> to vector<8x16xf32>
    %213 = arith.subf %205, %212 : vector<8x16xf32>
    %214 = math.exp %213 : vector<8x16xf32>
    %cst_105 = arith.constant dense<0.000000e+00> : vector<8xf32>
    %215 = vector.multi_reduction <add>, %214, %cst_105 [1] : vector<8x16xf32> to vector<8xf32>
    %216 = vector.shape_cast %215 : vector<8xf32> to vector<8x1xf32>
    %217 = tpu.reciprocal %216 {approx = true} : vector<8x1xf32> -> vector<8x1xf32>
    %218 = vector.broadcast %217 : vector<8x1xf32> to vector<8x16xf32>
    %219 = arith.mulf %214, %218 : vector<8x16xf32>
    %cst_106 = arith.constant dense<0xFF800000> : vector<8xf32>
    %220 = vector.multi_reduction <maximumf>, %209, %cst_106 [1] : vector<8x16xf32> to vector<8xf32>
    %221 = vector.shape_cast %220 : vector<8xf32> to vector<8x1xf32>
    %222 = vector.broadcast %221 : vector<8x1xf32> to vector<8x16xf32>
    %223 = arith.subf %209, %222 : vector<8x16xf32>
    %224 = math.exp %223 : vector<8x16xf32>
    %cst_107 = arith.constant dense<0.000000e+00> : vector<8xf32>
    %225 = vector.multi_reduction <add>, %224, %cst_107 [1] : vector<8x16xf32> to vector<8xf32>
    %226 = vector.shape_cast %225 : vector<8xf32> to vector<8x1xf32>
    %227 = tpu.reciprocal %226 {approx = true} : vector<8x1xf32> -> vector<8x1xf32>
    %228 = vector.broadcast %227 : vector<8x1xf32> to vector<8x16xf32>
    %229 = arith.mulf %224, %228 : vector<8x16xf32>
    %c0_108 = arith.constant 0 : index
    %c0_109 = arith.constant 0 : index
    %c2 = arith.constant 2 : index
    %c0_110 = arith.constant 0 : index
    %230 = vector.load %arg17[%c0_108, %c0_109, %c2, %c0_110] : memref<1x8x3x16xf32, #tpu.memory_space<vmem>>, vector<1x8x1x16xf32>
    %231 = vector.shape_cast %230 : vector<1x8x1x16xf32> to vector<8x16xf32>
    %232 = vector.shape_cast %219 : vector<8x16xf32> to vector<1x8x1x16xf32>
    tpu.vector_store %arg17[%c0_108, %c0_109, %c2, %c0_110], %232 {strides = array<i32>} : memref<1x8x3x16xf32, #tpu.memory_space<vmem>>, vector<1x8x1x16xf32>,
    %c0_111 = arith.constant 0 : index
    %c0_112 = arith.constant 0 : index
    %c2_113 = arith.constant 2 : index
    %c0_114 = arith.constant 0 : index
    %233 = vector.load %arg18[%c0_111, %c0_112, %c2_113, %c0_114] : memref<1x8x3x16xf32, #tpu.memory_space<vmem>>, vector<1x8x1x16xf32>
    %234 = vector.shape_cast %233 : vector<1x8x1x16xf32> to vector<8x16xf32>
    %235 = vector.shape_cast %229 : vector<8x16xf32> to vector<1x8x1x16xf32>
    tpu.vector_store %arg18[%c0_111, %c0_112, %c2_113, %c0_114], %235 {strides = array<i32>} : memref<1x8x3x16xf32, #tpu.memory_space<vmem>>, vector<1x8x1x16xf32>,
    return
  }
  func.func @transform_0(%arg0: i32) -> (i32, i32, i32) {
    %c0_i32 = arith.constant 0 : i32
    %c0_i32_0 = arith.constant 0 : i32
    %c0_i32_1 = arith.constant 0 : i32
    return %arg0, %c0_i32, %c0_i32_0 : i32, i32, i32
  }
  func.func @transform_1(%arg0: i32) -> (i32, i32, i32) {
    %c0_i32 = arith.constant 0 : i32
    %c0_i32_0 = arith.constant 0 : i32
    %c0_i32_1 = arith.constant 0 : i32
    return %arg0, %c0_i32, %c0_i32_0 : i32, i32, i32
  }
  func.func @transform_2(%arg0: i32) -> (i32, i32, i32) {
    %c0_i32 = arith.constant 0 : i32
    %c0_i32_0 = arith.constant 0 : i32
    %c0_i32_1 = arith.constant 0 : i32
    return %arg0, %c0_i32, %c0_i32_0 : i32, i32, i32
  }
  func.func @transform_3(%arg0: i32) -> (i32, i32, i32) {
    %c0_i32 = arith.constant 0 : i32
    %c0_i32_0 = arith.constant 0 : i32
    %c0_i32_1 = arith.constant 0 : i32
    return %arg0, %c0_i32, %c0_i32_0 : i32, i32, i32
  }
  func.func @transform_4(%arg0: i32) -> (i32, i32, i32) {
    %c0_i32 = arith.constant 0 : i32
    %c0_i32_0 = arith.constant 0 : i32
    %c0_i32_1 = arith.constant 0 : i32
    return %arg0, %c0_i32, %c0_i32_0 : i32, i32, i32
  }
  func.func @transform_5(%arg0: i32) -> (i32, i32, i32) {
    %c0_i32 = arith.constant 0 : i32
    %c0_i32_0 = arith.constant 0 : i32
    %c0_i32_1 = arith.constant 0 : i32
    return %arg0, %c0_i32, %c0_i32_0 : i32, i32, i32
  }
  func.func @transform_6(%arg0: i32) -> (i32, i32) {
    %c0_i32 = arith.constant 0 : i32
    %c0_i32_0 = arith.constant 0 : i32
    %c0_i32_1 = arith.constant 0 : i32
    return %c0_i32, %c0_i32_0 : i32, i32
  }
  func.func @transform_7(%arg0: i32) -> (i32, i32) {
    %c0_i32 = arith.constant 0 : i32
    %c0_i32_0 = arith.constant 0 : i32
    %c0_i32_1 = arith.constant 0 : i32
    return %c0_i32, %c0_i32_0 : i32, i32
  }
  func.func @transform_8(%arg0: i32) -> (i32, i32) {
    %c0_i32 = arith.constant 0 : i32
    %c0_i32_0 = arith.constant 0 : i32
    %c0_i32_1 = arith.constant 0 : i32
    return %c0_i32, %c0_i32_0 : i32, i32
  }
  func.func @transform_9(%arg0: i32) -> (i32, i32) {
    %c0_i32 = arith.constant 0 : i32
    %c0_i32_0 = arith.constant 0 : i32
    %c0_i32_1 = arith.constant 0 : i32
    return %c0_i32, %c0_i32_0 : i32, i32
  }
  func.func @transform_10(%arg0: i32) -> (i32, i32) {
    %c0_i32 = arith.constant 0 : i32
    %c0_i32_0 = arith.constant 0 : i32
    %c0_i32_1 = arith.constant 0 : i32
    return %c0_i32, %c0_i32_0 : i32, i32
  }
  func.func @transform_11(%arg0: i32) -> (i32, i32) {
    %c0_i32 = arith.constant 0 : i32
    %c0_i32_0 = arith.constant 0 : i32
    %c0_i32_1 = arith.constant 0 : i32
    return %c0_i32, %c0_i32_0 : i32, i32
  }
  func.func @transform_12(%arg0: i32) -> (i32, i32) {
    %c0_i32 = arith.constant 0 : i32
    %c0_i32_0 = arith.constant 0 : i32
    %c0_i32_1 = arith.constant 0 : i32
    return %c0_i32, %c0_i32_0 : i32, i32
  }
  func.func @transform_13(%arg0: i32) -> (i32, i32) {
    %c0_i32 = arith.constant 0 : i32
    %c0_i32_0 = arith.constant 0 : i32
    %c0_i32_1 = arith.constant 0 : i32
    return %c0_i32, %c0_i32_0 : i32, i32
  }
  func.func @transform_14(%arg0: i32) -> (i32, i32) {
    %c0_i32 = arith.constant 0 : i32
    %c0_i32_0 = arith.constant 0 : i32
    %c0_i32_1 = arith.constant 0 : i32
    return %c0_i32, %c0_i32_0 : i32, i32
  }
  func.func @transform_15(%arg0: i32) -> (i32, i32) {
    %c0_i32 = arith.constant 0 : i32
    %c0_i32_0 = arith.constant 0 : i32
    %c0_i32_1 = arith.constant 0 : i32
    return %c0_i32, %c0_i32_0 : i32, i32
  }
  func.func @transform_16(%arg0: i32) -> (i32, i32, i32, i32) {
    %c0_i32 = arith.constant 0 : i32
    %c0_i32_0 = arith.constant 0 : i32
    %c0_i32_1 = arith.constant 0 : i32
    %c0_i32_2 = arith.constant 0 : i32
    return %arg0, %c0_i32, %c0_i32_0, %c0_i32_1 : i32, i32, i32, i32
  }
  func.func @transform_17(%arg0: i32) -> (i32, i32, i32, i32) {
    %c0_i32 = arith.constant 0 : i32
    %c0_i32_0 = arith.constant 0 : i32
    %c0_i32_1 = arith.constant 0 : i32
    %c0_i32_2 = arith.constant 0 : i32
    return %arg0, %c0_i32, %c0_i32_0, %c0_i32_1 : i32, i32, i32, i32
  }
}

</mosaic_0001>

<llo_original>
// kernel: tpu_custom_call.1
$region0: #{tpu_custom_call.1}
  #allocation0 [shape = 'u32[]', space=smem, size = 0x4, offset = 0x4, fixed_abs, tag = 'smem constant byte address 0x4 - core index']
  #allocation1 [shape = 'u32[144,128]{1,0:T(1,128)}', space=vmem, size = 0x12000, scoped, tag = 'internal scratch']
  %s0 = inlined_call_operand.vmem [shape: bf16[2,16,32], index: 0, kind: input, shape index: {}]
  %s1 = inlined_call_operand.vmem [shape: bf16[2,8,32], index: 1, kind: input, shape index: {}]
  %s2 = inlined_call_operand.vmem [shape: bf16[2,8,32], index: 2, kind: input, shape index: {}]
  %s3 = inlined_call_operand.vmem [shape: f32[2,8,3], index: 3, kind: input, shape index: {}]
  %s4 = inlined_call_operand.vmem [shape: f32[2,8,1], index: 4, kind: input, shape index: {}]
  %s5 = inlined_call_operand.vmem [shape: f32[2,1,16], index: 5, kind: input, shape index: {}]
  %s6 = inlined_call_operand.vmem [shape: bf16[64,32], index: 6, kind: input, shape index: {}]
  %s7 = inlined_call_operand.vmem [shape: f32[1,32], index: 7, kind: input, shape index: {}]
  %s8 = inlined_call_operand.vmem [shape: bf16[64,32], index: 8, kind: input, shape index: {}]
  %s9 = inlined_call_operand.vmem [shape: f32[1,32], index: 9, kind: input, shape index: {}]
  %s10 = inlined_call_operand.vmem [shape: bf16[32,32], index: 10, kind: input, shape index: {}]
  %s11 = inlined_call_operand.vmem [shape: f32[1,32], index: 11, kind: input, shape index: {}]
  %s12 = inlined_call_operand.vmem [shape: bf16[32,32], index: 12, kind: input, shape index: {}]
  %s13 = inlined_call_operand.vmem [shape: f32[1,32], index: 13, kind: input, shape index: {}]
  %s14 = inlined_call_operand.vmem [shape: bf16[32,64], index: 14, kind: input, shape index: {}]
  %s15 = inlined_call_operand.vmem [shape: f32[1,64], index: 15, kind: input, shape index: {}]
  %s16 = inlined_call_operand.vmem [shape: f32[2,8,3,16], index: 16, kind: output, shape index: {0}]
  %s17 = inlined_call_operand.vmem [shape: f32[2,8,3,16], index: 17, kind: output, shape index: {1}]
  %18 = xla_tuple %s16, %s17
  %s19 = sld [smem:[#allocation0]]
  $region105: #{tpu_custom_call.1} parent=0
    _
  %s21 = ssub.s32 1, %s19
  %s22 = scalar_select 0, %s21, %s19
  loop: start=0, step=1, limit=4
  $region2: #{tpu_custom_call.1} parent=0 // loop_pre_header
    _
  $region3: #{tpu_custom_call.1} parent=0 // loop_header
    %s24 = sphi 0, %s28
    %p25 = scmp.ge.s32.totalorder %s24, 4
    %s34 = sphi 0, %s36
    %s37 = sphi 0, %s34
    %s38 = sphi 0, %s37
    %s54 = sphi 0, %s38
    %s60 = sphi 0, %s62
    %s63 = sphi 0, %s60
    %s64 = sphi 0, %s63
    %s80 = sphi 0, %s64
    %s86 = sphi 0, %s88
    %s89 = sphi 0, %s86
    %s90 = sphi 0, %s89
    %s106 = sphi 0, %s90
    %s112 = sphi 0, %s114
    %s115 = sphi 0, %s112
    %s116 = sphi 0, %s115
    %s132 = sphi 0, %s116
    %s138 = sphi 0, %s140
    %s141 = sphi 0, %s138
    %s142 = sphi 0, %s141
    %s158 = sphi 0, %s142
    %s164 = sphi 0, %s166
    %s167 = sphi 0, %s164
    %s168 = sphi 0, %s167
    %s184 = sphi 0, %s168
    %s188 = sphi 0, %s188
    %s190 = sphi 0, %s188
    %s191 = sphi 0, %s190
    %s205 = sphi 0, %s191
    %s209 = sphi 0, %s209
    %s211 = sphi 0, %s209
    %s212 = sphi 0, %s211
    %s226 = sphi 0, %s212
    %s230 = sphi 0, %s230
    %s232 = sphi 0, %s230
    %s233 = sphi 0, %s232
    %s247 = sphi 0, %s233
    %s251 = sphi 0, %s251
    %s253 = sphi 0, %s251
    %s254 = sphi 0, %s253
    %s268 = sphi 0, %s254
    %s272 = sphi 0, %s272
    %s274 = sphi 0, %s272
    %s275 = sphi 0, %s274
    %s289 = sphi 0, %s275
    %s293 = sphi 0, %s293
    %s295 = sphi 0, %s293
    %s296 = sphi 0, %s295
    %s310 = sphi 0, %s296
    %s314 = sphi 0, %s314
    %s316 = sphi 0, %s314
    %s317 = sphi 0, %s316
    %s331 = sphi 0, %s317
    %s335 = sphi 0, %s335
    %s337 = sphi 0, %s335
    %s338 = sphi 0, %s337
    %s352 = sphi 0, %s338
    %s356 = sphi 0, %s356
    %s358 = sphi 0, %s356
    %s359 = sphi 0, %s358
    %s373 = sphi 0, %s359
    %s377 = sphi 0, %s377
    %s379 = sphi 0, %s377
    %s380 = sphi 0, %s379
    %s394 = sphi 0, %s380
    %s400 = sphi 0, %s402
    %s403 = sphi 0, %s400
    %s404 = sphi 0, %s403
    %s420 = sphi 0, %s404
    %s426 = sphi 0, %s428
    %s429 = sphi 0, %s426
    %s430 = sphi 0, %s429
    %s446 = sphi 0, %s430
  $region4: #{tpu_custom_call.1} parent=0 // loop_header_branch
    %27 = sbr.rel (%p25) target = $region8
  $region5: #{tpu_custom_call.1} parent=0 // loop_body
    %s29 = ssub.s32 %s24, 1
    %s30 = ssub.s32 %s24, 2
    %s31 = sadd.s32 %s24, 1
    %s32 = ssub.s32 %s24, %s31
    %p33 = scmp.eq.s32.totalorder %s32, 0
    %s35 = sadd.s32 %s34, 1
    %s36 = scalar_select %p33, %s34, %s35
    %p39 = pneg %p33
    %p40 = scmp.eq.s32.totalorder %s24, 1
    %p41 = por %p39, %p40
    %p42 = scmp.ne.s32.totalorder %s34, %s37
    %p43 = scmp.eq.s32.totalorder %s24, 0
    %p44 = por %p42, %p43
    %p45 = scmp.ne.s32.totalorder %s34, %s37
    %p46 = scmp.eq.s32.totalorder %s29, 1
    %p47 = por %p45, %p46
    %p48 = scmp.ne.s32.totalorder %s37, %s38
    %p49 = scmp.eq.s32.totalorder %s29, 0
    %p50 = por %p48, %p49
    %p51 = scmp.ne.s32.totalorder %s37, %s38
    %p52 = scmp.eq.s32.totalorder %s30, 1
    %p53 = por %p51, %p52
    %p55 = scmp.ne.s32.totalorder %s38, %s54
    %p56 = scmp.eq.s32.totalorder %s30, 0
    %p57 = por %p55, %p56
    %s58 = ssub.s32 %s24, %s31
    %p59 = scmp.eq.s32.totalorder %s58, 0
    %s61 = sadd.s32 %s60, 1
    %s62 = scalar_select %p59, %s60, %s61
    %p65 = pneg %p59
    %p66 = scmp.eq.s32.totalorder %s24, 1
    %p67 = por %p65, %p66
    %p68 = scmp.ne.s32.totalorder %s60, %s63
    %p69 = scmp.eq.s32.totalorder %s24, 0
    %p70 = por %p68, %p69
    %p71 = scmp.ne.s32.totalorder %s60, %s63
    %p72 = scmp.eq.s32.totalorder %s29, 1
    %p73 = por %p71, %p72
    %p74 = scmp.ne.s32.totalorder %s63, %s64
    %p75 = scmp.eq.s32.totalorder %s29, 0
    %p76 = por %p74, %p75
    %p77 = scmp.ne.s32.totalorder %s63, %s64
    %p78 = scmp.eq.s32.totalorder %s30, 1
    %p79 = por %p77, %p78
    %p81 = scmp.ne.s32.totalorder %s64, %s80
    %p82 = scmp.eq.s32.totalorder %s30, 0
    %p83 = por %p81, %p82
    %s84 = ssub.s32 %s24, %s31
    %p85 = scmp.eq.s32.totalorder %s84, 0
    %s87 = sadd.s32 %s86, 1
    %s88 = scalar_select %p85, %s86, %s87
    %p91 = pneg %p85
    %p92 = scmp.eq.s32.totalorder %s24, 1
    %p93 = por %p91, %p92
    %p94 = scmp.ne.s32.totalorder %s86, %s89
    %p95 = scmp.eq.s32.totalorder %s24, 0
    %p96 = por %p94, %p95
    %p97 = scmp.ne.s32.totalorder %s86, %s89
    %p98 = scmp.eq.s32.totalorder %s29, 1
    %p99 = por %p97, %p98
    %p100 = scmp.ne.s32.totalorder %s89, %s90
    %p101 = scmp.eq.s32.totalorder %s29, 0
    %p102 = por %p100, %p101
    %p103 = scmp.ne.s32.totalorder %s89, %s90
    %p104 = scmp.eq.s32.totalorder %s30, 1
    %p105 = por %p103, %p104
    %p107 = scmp.ne.s32.totalorder %s90, %s106
    %p108 = scmp.eq.s32.totalorder %s30, 0
    %p109 = por %p107, %p108
    %s110 = ssub.s32 %s24, %s31
    %p111 = scmp.eq.s32.totalorder %s110, 0
    %s113 = sadd.s32 %s112, 1
    %s114 = scalar_select %p111, %s112, %s113
    %p117 = pneg %p111
    %p118 = scmp.eq.s32.totalorder %s24, 1
    %p119 = por %p117, %p118
    %p120 = scmp.ne.s32.totalorder %s112, %s115
    %p121 = scmp.eq.s32.totalorder %s24, 0
    %p122 = por %p120, %p121
    %p123 = scmp.ne.s32.totalorder %s112, %s115
    %p124 = scmp.eq.s32.totalorder %s29, 1
    %p125 = por %p123, %p124
    %p126 = scmp.ne.s32.totalorder %s115, %s116
    %p127 = scmp.eq.s32.totalorder %s29, 0
    %p128 = por %p126, %p127
    %p129 = scmp.ne.s32.totalorder %s115, %s116
    %p130 = scmp.eq.s32.totalorder %s30, 1
    %p131 = por %p129, %p130
    %p133 = scmp.ne.s32.totalorder %s116, %s132
    %p134 = scmp.eq.s32.totalorder %s30, 0
    %p135 = por %p133, %p134
    %s136 = ssub.s32 %s24, %s31
    %p137 = scmp.eq.s32.totalorder %s136, 0
    %s139 = sadd.s32 %s138, 1
    %s140 = scalar_select %p137, %s138, %s139
    %p143 = pneg %p137
    %p144 = scmp.eq.s32.totalorder %s24, 1
    %p145 = por %p143, %p144
    %p146 = scmp.ne.s32.totalorder %s138, %s141
    %p147 = scmp.eq.s32.totalorder %s24, 0
    %p148 = por %p146, %p147
    %p149 = scmp.ne.s32.totalorder %s138, %s141
    %p150 = scmp.eq.s32.totalorder %s29, 1
    %p151 = por %p149, %p150
    %p152 = scmp.ne.s32.totalorder %s141, %s142
    %p153 = scmp.eq.s32.totalorder %s29, 0
    %p154 = por %p152, %p153
    %p155 = scmp.ne.s32.totalorder %s141, %s142
    %p156 = scmp.eq.s32.totalorder %s30, 1
    %p157 = por %p155, %p156
    %p159 = scmp.ne.s32.totalorder %s142, %s158
    %p160 = scmp.eq.s32.totalorder %s30, 0
    %p161 = por %p159, %p160
    %s162 = ssub.s32 %s24, %s31
    %p163 = scmp.eq.s32.totalorder %s162, 0
    %s165 = sadd.s32 %s164, 1
    %s166 = scalar_select %p163, %s164, %s165
    %p169 = pneg %p163
    %p170 = scmp.eq.s32.totalorder %s24, 1
    %p171 = por %p169, %p170
    %p172 = scmp.ne.s32.totalorder %s164, %s167
    %p173 = scmp.eq.s32.totalorder %s24, 0
    %p174 = por %p172, %p173
    %p175 = scmp.ne.s32.totalorder %s164, %s167
    %p176 = scmp.eq.s32.totalorder %s29, 1
    %p177 = por %p175, %p176
    %p178 = scmp.ne.s32.totalorder %s167, %s168
    %p179 = scmp.eq.s32.totalorder %s29, 0
    %p180 = por %p178, %p179
    %p181 = scmp.ne.s32.totalorder %s167, %s168
    %p182 = scmp.eq.s32.totalorder %s30, 1
    %p183 = por %p181, %p182
    %p185 = scmp.ne.s32.totalorder %s168, %s184
    %p186 = scmp.eq.s32.totalorder %s30, 0
    %p187 = por %p185, %p186
    %s189 = sadd.s32 %s188, 1
    %p192 = scmp.eq.s32.totalorder %s24, 1
    %p193 = scmp.ne.s32.totalorder %s188, %s190
    %p194 = scmp.eq.s32.totalorder %s24, 0
    %p195 = por %p193, %p194
    %p196 = scmp.ne.s32.totalorder %s188, %s190
    %p197 = scmp.eq.s32.totalorder %s29, 1
    %p198 = por %p196, %p197
    %p199 = scmp.ne.s32.totalorder %s190, %s191
    %p200 = scmp.eq.s32.totalorder %s29, 0
    %p201 = por %p199, %p200
    %p202 = scmp.ne.s32.totalorder %s190, %s191
    %p203 = scmp.eq.s32.totalorder %s30, 1
    %p204 = por %p202, %p203
    %p206 = scmp.ne.s32.totalorder %s191, %s205
    %p207 = scmp.eq.s32.totalorder %s30, 0
    %p208 = por %p206, %p207
    %s210 = sadd.s32 %s209, 1
    %p213 = scmp.eq.s32.totalorder %s24, 1
    %p214 = scmp.ne.s32.totalorder %s209, %s211
    %p215 = scmp.eq.s32.totalorder %s24, 0
    %p216 = por %p214, %p215
    %p217 = scmp.ne.s32.totalorder %s209, %s211
    %p218 = scmp.eq.s32.totalorder %s29, 1
    %p219 = por %p217, %p218
    %p220 = scmp.ne.s32.totalorder %s211, %s212
    %p221 = scmp.eq.s32.totalorder %s29, 0
    %p222 = por %p220, %p221
    %p223 = scmp.ne.s32.totalorder %s211, %s212
    %p224 = scmp.eq.s32.totalorder %s30, 1
    %p225 = por %p223, %p224
    %p227 = scmp.ne.s32.totalorder %s212, %s226
    %p228 = scmp.eq.s32.totalorder %s30, 0
    %p229 = por %p227, %p228
    %s231 = sadd.s32 %s230, 1
    %p234 = scmp.eq.s32.totalorder %s24, 1
    %p235 = scmp.ne.s32.totalorder %s230, %s232
    %p236 = scmp.eq.s32.totalorder %s24, 0
    %p237 = por %p235, %p236
    %p238 = scmp.ne.s32.totalorder %s230, %s232
    %p239 = scmp.eq.s32.totalorder %s29, 1
    %p240 = por %p238, %p239
    %p241 = scmp.ne.s32.totalorder %s232, %s233
    %p242 = scmp.eq.s32.totalorder %s29, 0
    %p243 = por %p241, %p242
    %p244 = scmp.ne.s32.totalorder %s232, %s233
    %p245 = scmp.eq.s32.totalorder %s30, 1
    %p246 = por %p244, %p245
    %p248 = scmp.ne.s32.totalorder %s233, %s247
    %p249 = scmp.eq.s32.totalorder %s30, 0
    %p250 = por %p248, %p249
    %s252 = sadd.s32 %s251, 1
    %p255 = scmp.eq.s32.totalorder %s24, 1
    %p256 = scmp.ne.s32.totalorder %s251, %s253
    %p257 = scmp.eq.s32.totalorder %s24, 0
    %p258 = por %p256, %p257
    %p259 = scmp.ne.s32.totalorder %s251, %s253
    %p260 = scmp.eq.s32.totalorder %s29, 1
    %p261 = por %p259, %p260
    %p262 = scmp.ne.s32.totalorder %s253, %s254
    %p263 = scmp.eq.s32.totalorder %s29, 0
    %p264 = por %p262, %p263
    %p265 = scmp.ne.s32.totalorder %s253, %s254
    %p266 = scmp.eq.s32.totalorder %s30, 1
    %p267 = por %p265, %p266
    %p269 = scmp.ne.s32.totalorder %s254, %s268
    %p270 = scmp.eq.s32.totalorder %s30, 0
    %p271 = por %p269, %p270
    %s273 = sadd.s32 %s272, 1
    %p276 = scmp.eq.s32.totalorder %s24, 1
    %p277 = scmp.ne.s32.totalorder %s272, %s274
    %p278 = scmp.eq.s32.totalorder %s24, 0
    %p279 = por %p277, %p278
    %p280 = scmp.ne.s32.totalorder %s272, %s274
    %p281 = scmp.eq.s32.totalorder %s29, 1
    %p282 = por %p280, %p281
    %p283 = scmp.ne.s32.totalorder %s274, %s275
    %p284 = scmp.eq.s32.totalorder %s29, 0
    %p285 = por %p283, %p284
    %p286 = scmp.ne.s32.totalorder %s274, %s275
    %p287 = scmp.eq.s32.totalorder %s30, 1
    %p288 = por %p286, %p287
    %p290 = scmp.ne.s32.totalorder %s275, %s289
    %p291 = scmp.eq.s32.totalorder %s30, 0
    %p292 = por %p290, %p291
    %s294 = sadd.s32 %s293, 1
    %p297 = scmp.eq.s32.totalorder %s24, 1
    %p298 = scmp.ne.s32.totalorder %s293, %s295
    %p299 = scmp.eq.s32.totalorder %s24, 0
    %p300 = por %p298, %p299
    %p301 = scmp.ne.s32.totalorder %s293, %s295
    %p302 = scmp.eq.s32.totalorder %s29, 1
    %p303 = por %p301, %p302
    %p304 = scmp.ne.s32.totalorder %s295, %s296
    %p305 = scmp.eq.s32.totalorder %s29, 0
    %p306 = por %p304, %p305
    %p307 = scmp.ne.s32.totalorder %s295, %s296
    %p308 = scmp.eq.s32.totalorder %s30, 1
    %p309 = por %p307, %p308
    %p311 = scmp.ne.s32.totalorder %s296, %s310
    %p312 = scmp.eq.s32.totalorder %s30, 0
    %p313 = por %p311, %p312
    %s315 = sadd.s32 %s314, 1
    %p318 = scmp.eq.s32.totalorder %s24, 1
    %p319 = scmp.ne.s32.totalorder %s314, %s316
    %p320 = scmp.eq.s32.totalorder %s24, 0
    %p321 = por %p319, %p320
    %p322 = scmp.ne.s32.totalorder %s314, %s316
    %p323 = scmp.eq.s32.totalorder %s29, 1
    %p324 = por %p322, %p323
    %p325 = scmp.ne.s32.totalorder %s316, %s317
    %p326 = scmp.eq.s32.totalorder %s29, 0
    %p327 = por %p325, %p326
    %p328 = scmp.ne.s32.totalorder %s316, %s317
    %p329 = scmp.eq.s32.totalorder %s30, 1
    %p330 = por %p328, %p329
    %p332 = scmp.ne.s32.totalorder %s317, %s331
    %p333 = scmp.eq.s32.totalorder %s30, 0
    %p334 = por %p332, %p333
    %s336 = sadd.s32 %s335, 1
    %p339 = scmp.eq.s32.totalorder %s24, 1
    %p340 = scmp.ne.s32.totalorder %s335, %s337
    %p341 = scmp.eq.s32.totalorder %s24, 0
    %p342 = por %p340, %p341
    %p343 = scmp.ne.s32.totalorder %s335, %s337
    %p344 = scmp.eq.s32.totalorder %s29, 1
    %p345 = por %p343, %p344
    %p346 = scmp.ne.s32.totalorder %s337, %s338
    %p347 = scmp.eq.s32.totalorder %s29, 0
    %p348 = por %p346, %p347
    %p349 = scmp.ne.s32.totalorder %s337, %s338
    %p350 = scmp.eq.s32.totalorder %s30, 1
    %p351 = por %p349, %p350
    %p353 = scmp.ne.s32.totalorder %s338, %s352
    %p354 = scmp.eq.s32.totalorder %s30, 0
    %p355 = por %p353, %p354
    %s357 = sadd.s32 %s356, 1
    %p360 = scmp.eq.s32.totalorder %s24, 1
    %p361 = scmp.ne.s32.totalorder %s356, %s358
    %p362 = scmp.eq.s32.totalorder %s24, 0
    %p363 = por %p361, %p362
    %p364 = scmp.ne.s32.totalorder %s356, %s358
    %p365 = scmp.eq.s32.totalorder %s29, 1
    %p366 = por %p364, %p365
    %p367 = scmp.ne.s32.totalorder %s358, %s359
    %p368 = scmp.eq.s32.totalorder %s29, 0
    %p369 = por %p367, %p368
    %p370 = scmp.ne.s32.totalorder %s358, %s359
    %p371 = scmp.eq.s32.totalorder %s30, 1
    %p372 = por %p370, %p371
    %p374 = scmp.ne.s32.totalorder %s359, %s373
    %p375 = scmp.eq.s32.totalorder %s30, 0
    %p376 = por %p374, %p375
    %s378 = sadd.s32 %s377, 1
    %p381 = scmp.eq.s32.totalorder %s24, 1
    %p382 = scmp.ne.s32.totalorder %s377, %s379
    %p383 = scmp.eq.s32.totalorder %s24, 0
    %p384 = por %p382, %p383
    %p385 = scmp.ne.s32.totalorder %s377, %s379
    %p386 = scmp.eq.s32.totalorder %s29, 1
    %p387 = por %p385, %p386
    %p388 = scmp.ne.s32.totalorder %s379, %s380
    %p389 = scmp.eq.s32.totalorder %s29, 0
    %p390 = por %p388, %p389
    %p391 = scmp.ne.s32.totalorder %s379, %s380
    %p392 = scmp.eq.s32.totalorder %s30, 1
    %p393 = por %p391, %p392
    %p395 = scmp.ne.s32.totalorder %s380, %s394
    %p396 = scmp.eq.s32.totalorder %s30, 0
    %p397 = por %p395, %p396
    %s398 = ssub.s32 %s24, %s31
    %p399 = scmp.eq.s32.totalorder %s398, 0
    %s401 = sadd.s32 %s400, 1
    %s402 = scalar_select %p399, %s400, %s401
    %p405 = pneg %p399
    %p406 = scmp.eq.s32.totalorder %s24, 1
    %p407 = por %p405, %p406
    %p408 = scmp.ne.s32.totalorder %s400, %s403
    %p409 = scmp.eq.s32.totalorder %s24, 0
    %p410 = por %p408, %p409
    %p411 = scmp.ne.s32.totalorder %s400, %s403
    %p412 = scmp.eq.s32.totalorder %s29, 1
    %p413 = por %p411, %p412
    %p414 = scmp.ne.s32.totalorder %s403, %s404
    %p415 = scmp.eq.s32.totalorder %s29, 0
    %p416 = por %p414, %p415
    %p417 = scmp.ne.s32.totalorder %s403, %s404
    %p418 = scmp.eq.s32.totalorder %s30, 1
    %p419 = por %p417, %p418
    %p421 = scmp.ne.s32.totalorder %s404, %s420
    %p422 = scmp.eq.s32.totalorder %s30, 0
    %p423 = por %p421, %p422
    %s424 = ssub.s32 %s24, %s31
    %p425 = scmp.eq.s32.totalorder %s424, 0
    %s427 = sadd.s32 %s426, 1
    %s428 = scalar_select %p425, %s426, %s427
    %p431 = pneg %p425
    %p432 = scmp.eq.s32.totalorder %s24, 1
    %p433 = por %p431, %p432
    %p434 = scmp.ne.s32.totalorder %s426, %s429
    %p435 = scmp.eq.s32.totalorder %s24, 0
    %p436 = por %p434, %p435
    %p437 = scmp.ne.s32.totalorder %s426, %s429
    %p438 = scmp.eq.s32.totalorder %s29, 1
    %p439 = por %p437, %p438
    %p440 = scmp.ne.s32.totalorder %s429, %s430
    %p441 = scmp.eq.s32.totalorder %s29, 0
    %p442 = por %p440, %p441
    %p443 = scmp.ne.s32.totalorder %s429, %s430
    %p444 = scmp.eq.s32.totalorder %s30, 1
    %p445 = por %p443, %p444
    %p447 = scmp.ne.s32.totalorder %s430, %s446
    %p448 = scmp.eq.s32.totalorder %s30, 0
    %p449 = por %p447, %p448
    %p450 = scmp.le.s32.totalorder 1, %s24
    %p451 = scmp.lt.s32.totalorder %s24, 3
    %p452 = pnand %p450, %p451
    %p453 = pneg %p452
    // Predicated region
    $region9: #{tpu_custom_call.1} parent=5 // pred_check
      _
    $region10: #{tpu_custom_call.1} parent=5 // pred_check_branch
      %455 = sbr.rel (%p452) target = $region12
    $region11: #{tpu_custom_call.1} parent=5 // pred_region
      %s456 = ssub.s32 %s24, 1
      // Predicated region
      $region13: #{tpu_custom_call.1} parent=11 // pred_check
        %p457 = pneg %p201
      $region14: #{tpu_custom_call.1} parent=11 // pred_check_branch
        %459 = sbr.rel (%p457) target = $region16
      $region15: #{tpu_custom_call.1} parent=11 // pred_region
        _
      $region16: #{tpu_custom_call.1} parent=11 // pred_fallthru
        _
      // Predicated region
      $region17: #{tpu_custom_call.1} parent=11 // pred_check
        %p460 = pneg %p222
      $region18: #{tpu_custom_call.1} parent=11 // pred_check_branch
        %462 = sbr.rel (%p460) target = $region20
      $region19: #{tpu_custom_call.1} parent=11 // pred_region
        _
      $region20: #{tpu_custom_call.1} parent=11 // pred_fallthru
        _
      // Predicated region
      $region21: #{tpu_custom_call.1} parent=11 // pred_check
        %p463 = pneg %p243
      $region22: #{tpu_custom_call.1} parent=11 // pred_check_branch
        %465 = sbr.rel (%p463) target = $region24
      $region23: #{tpu_custom_call.1} parent=11 // pred_region
        _
      $region24: #{tpu_custom_call.1} parent=11 // pred_fallthru
        _
      // Predicated region
      $region25: #{tpu_custom_call.1} parent=11 // pred_check
        %p466 = pneg %p264
      $region26: #{tpu_custom_call.1} parent=11 // pred_check_branch
        %468 = sbr.rel (%p466) target = $region28
      $region27: #{tpu_custom_call.1} parent=11 // pred_region
        _
      $region28: #{tpu_custom_call.1} parent=11 // pred_fallthru
        _
      // Predicated region
      $region29: #{tpu_custom_call.1} parent=11 // pred_check
        %p469 = pneg %p285
      $region30: #{tpu_custom_call.1} parent=11 // pred_check_branch
        %471 = sbr.rel (%p469) target = $region32
      $region31: #{tpu_custom_call.1} parent=11 // pred_region
        _
      $region32: #{tpu_custom_call.1} parent=11 // pred_fallthru
        _
      // Predicated region
      $region33: #{tpu_custom_call.1} parent=11 // pred_check
        %p472 = pneg %p306
      $region34: #{tpu_custom_call.1} parent=11 // pred_check_branch
        %474 = sbr.rel (%p472) target = $region36
      $region35: #{tpu_custom_call.1} parent=11 // pred_region
        _
      $region36: #{tpu_custom_call.1} parent=11 // pred_fallthru
        _
      // Predicated region
      $region37: #{tpu_custom_call.1} parent=11 // pred_check
        %p475 = pneg %p327
      $region38: #{tpu_custom_call.1} parent=11 // pred_check_branch
        %477 = sbr.rel (%p475) target = $region40
      $region39: #{tpu_custom_call.1} parent=11 // pred_region
        _
      $region40: #{tpu_custom_call.1} parent=11 // pred_fallthru
        _
      // Predicated region
      $region41: #{tpu_custom_call.1} parent=11 // pred_check
        %p478 = pneg %p348
      $region42: #{tpu_custom_call.1} parent=11 // pred_check_branch
        %480 = sbr.rel (%p478) target = $region44
      $region43: #{tpu_custom_call.1} parent=11 // pred_region
        _
      $region44: #{tpu_custom_call.1} parent=11 // pred_fallthru
        _
      // Predicated region
      $region45: #{tpu_custom_call.1} parent=11 // pred_check
        %p481 = pneg %p369
      $region46: #{tpu_custom_call.1} parent=11 // pred_check_branch
        %483 = sbr.rel (%p481) target = $region48
      $region47: #{tpu_custom_call.1} parent=11 // pred_region
        _
      $region48: #{tpu_custom_call.1} parent=11 // pred_fallthru
        _
      // Predicated region
      $region49: #{tpu_custom_call.1} parent=11 // pred_check
        %p484 = pneg %p390
      $region50: #{tpu_custom_call.1} parent=11 // pred_check_branch
        %486 = sbr.rel (%p484) target = $region52
      $region51: #{tpu_custom_call.1} parent=11 // pred_region
        _
      $region52: #{tpu_custom_call.1} parent=11 // pred_fallthru
        _
    $region12: #{tpu_custom_call.1} parent=5 // pred_fallthru
      _
    %p487 = scmp.lt.s32.totalorder %s24, 2
    // Predicated region
    $region53: #{tpu_custom_call.1} parent=5 // pred_check
      %p488 = pneg %p487
    $region54: #{tpu_custom_call.1} parent=5 // pred_check_branch
      %490 = sbr.rel (%p488) target = $region56
    $region55: #{tpu_custom_call.1} parent=5 // pred_region
      // Predicated region
      $region57: #{tpu_custom_call.1} parent=55 // pred_check
        %p491 = pneg %p44
      $region58: #{tpu_custom_call.1} parent=55 // pred_check_branch
        %493 = sbr.rel (%p491) target = $region60
      $region59: #{tpu_custom_call.1} parent=55 // pred_region
        %p494 = scmp.lt.s32.totalorder %s24, 1
        %s495 = scalar_select %p494, %s24, 1
        %s496 = smul.addr %s495, 2
        %s497 = smul.addr %s496, 4
        %s498 = scalar_lea.vmem %s0, %s497
      $region60: #{tpu_custom_call.1} parent=55 // pred_fallthru
        _
      // Predicated region
      $region61: #{tpu_custom_call.1} parent=55 // pred_check
        %p499 = pneg %p70
      $region62: #{tpu_custom_call.1} parent=55 // pred_check_branch
        %501 = sbr.rel (%p499) target = $region64
      $region63: #{tpu_custom_call.1} parent=55 // pred_region
        %p502 = scmp.lt.s32.totalorder %s24, 1
        %s503 = scalar_select %p502, %s24, 1
        %s504 = smul.addr %s503, 4
        %s505 = scalar_lea.vmem %s1, %s504
      $region64: #{tpu_custom_call.1} parent=55 // pred_fallthru
        _
      // Predicated region
      $region65: #{tpu_custom_call.1} parent=55 // pred_check
        %p506 = pneg %p96
      $region66: #{tpu_custom_call.1} parent=55 // pred_check_branch
        %508 = sbr.rel (%p506) target = $region68
      $region67: #{tpu_custom_call.1} parent=55 // pred_region
        %p509 = scmp.lt.s32.totalorder %s24, 1
        %s510 = scalar_select %p509, %s24, 1
        %s511 = smul.addr %s510, 4
        %s512 = scalar_lea.vmem %s2, %s511
      $region68: #{tpu_custom_call.1} parent=55 // pred_fallthru
        _
      // Predicated region
      $region69: #{tpu_custom_call.1} parent=55 // pred_check
        %p513 = pneg %p122
      $region70: #{tpu_custom_call.1} parent=55 // pred_check_branch
        %515 = sbr.rel (%p513) target = $region72
      $region71: #{tpu_custom_call.1} parent=55 // pred_region
        %p516 = scmp.lt.s32.totalorder %s24, 1
        %s517 = scalar_select %p516, %s24, 1
        %s518 = smul.addr %s517, 8
        %s519 = scalar_lea.vmem %s3, %s518
      $region72: #{tpu_custom_call.1} parent=55 // pred_fallthru
        _
      // Predicated region
      $region73: #{tpu_custom_call.1} parent=55 // pred_check
        %p520 = pneg %p148
      $region74: #{tpu_custom_call.1} parent=55 // pred_check_branch
        %522 = sbr.rel (%p520) target = $region76
      $region75: #{tpu_custom_call.1} parent=55 // pred_region
        %p523 = scmp.lt.s32.totalorder %s24, 1
        %s524 = scalar_select %p523, %s24, 1
        %s525 = smul.addr %s524, 8
        %s526 = scalar_lea.vmem %s4, %s525
      $region76: #{tpu_custom_call.1} parent=55 // pred_fallthru
        _
      // Predicated region
      $region77: #{tpu_custom_call.1} parent=55 // pred_check
        %p527 = pneg %p174
      $region78: #{tpu_custom_call.1} parent=55 // pred_check_branch
        %529 = sbr.rel (%p527) target = $region80
      $region79: #{tpu_custom_call.1} parent=55 // pred_region
        %p530 = scmp.lt.s32.totalorder %s24, 1
        %s531 = scalar_select %p530, %s24, 1
        %s532 = scalar_lea.vmem %s5, %s531
      $region80: #{tpu_custom_call.1} parent=55 // pred_fallthru
        _
    $region56: #{tpu_custom_call.1} parent=5 // pred_fallthru
      _
    %p533 = scmp.le.s32.totalorder 1, %s24
    %p534 = scmp.lt.s32.totalorder %s24, 3
    %p535 = pnand %p533, %p534
    %p536 = pneg %p535
    // Predicated region
    $region81: #{tpu_custom_call.1} parent=5 // pred_check
      _
    $region82: #{tpu_custom_call.1} parent=5 // pred_check_branch
      %538 = sbr.rel (%p535) target = $region84
    $region83: #{tpu_custom_call.1} parent=5 // pred_region
      %s539 = ssub.s32 %s24, 1
      %p540 = scmp.lt.s32.totalorder %s29, 1
      %s541 = scalar_select %p540, %s29, 1
      %s542 = smul.addr %s541, 2
      %s543 = smul.addr %s542, 4
      %s544 = scalar_lea.vmem %s0, %s543
      %p545 = pneg %p50
      %p546 = pneg %p47
      %p547 = scmp.lt.s32.totalorder %s29, 1
      %s548 = scalar_select %p547, %s29, 1
      %s549 = smul.addr %s548, 4
      %s550 = scalar_lea.vmem %s1, %s549
      %p551 = pneg %p76
      %p552 = pneg %p73
      %p553 = scmp.lt.s32.totalorder %s29, 1
      %s554 = scalar_select %p553, %s29, 1
      %s555 = smul.addr %s554, 4
      %s556 = scalar_lea.vmem %s2, %s555
      %p557 = pneg %p102
      %p558 = pneg %p99
      %p559 = scmp.lt.s32.totalorder %s29, 1
      %s560 = scalar_select %p559, %s29, 1
      %s561 = smul.addr %s560, 8
      %s562 = scalar_lea.vmem %s3, %s561
      %p563 = pneg %p128
      %p564 = pneg %p125
      %p565 = scmp.lt.s32.totalorder %s29, 1
      %s566 = scalar_select %p565, %s29, 1
      %s567 = smul.addr %s566, 8
      %s568 = scalar_lea.vmem %s4, %s567
      %p569 = pneg %p154
      %p570 = pneg %p151
      %p571 = scmp.lt.s32.totalorder %s29, 1
      %s572 = scalar_select %p571, %s29, 1
      %s573 = scalar_lea.vmem %s5, %s572
      %p574 = pneg %p180
      %p575 = pneg %p177
      %p576 = pneg %p201
      %p577 = pneg %p198
      %p578 = pneg %p222
      %p579 = pneg %p219
      %p580 = pneg %p243
      %p581 = pneg %p240
      %p582 = pneg %p264
      %p583 = pneg %p261
      %p584 = pneg %p285
      %p585 = pneg %p282
      %p586 = pneg %p306
      %p587 = pneg %p303
      %p588 = pneg %p327
      %p589 = pneg %p324
      %p590 = pneg %p348
      %p591 = pneg %p345
      %p592 = pneg %p369
      %p593 = pneg %p366
      %p594 = pneg %p390
      %p595 = pneg %p387
      %p596 = pneg %p416
      %p597 = pneg %p413
      %p598 = scmp.lt.s32.totalorder %s29, 1
      %s599 = scalar_select %p598, %s29, 1
      %s600 = smul.addr %s599, 8
      %s601 = smul.addr %s600, 4
      %s602 = scalar_lea.vmem %s16, %s601
      %p603 = pneg %p442
      %p604 = pneg %p439
      %p605 = scmp.lt.s32.totalorder %s29, 1
      %s606 = scalar_select %p605, %s29, 1
      %s607 = smul.addr %s606, 8
      %s608 = smul.addr %s607, 4
      %s609 = scalar_lea.vmem %s17, %s608
      %p610 = scmp.lt.s32.totalorder %s29, 1
      %s611 = scalar_select %p610, %s29, 1
      %s612 = smul.addr %s611, 2
      %s613 = smul.addr %s612, 4
      %s614 = scalar_lea.vmem %s0, %s613
      %p615 = scmp.lt.s32.totalorder %s29, 1
      %s616 = scalar_select %p615, %s29, 1
      %s617 = smul.addr %s616, 4
      %s618 = scalar_lea.vmem %s1, %s617
      %p619 = scmp.lt.s32.totalorder %s29, 1
      %s620 = scalar_select %p619, %s29, 1
      %s621 = smul.addr %s620, 4
      %s622 = scalar_lea.vmem %s2, %s621
      %p623 = scmp.lt.s32.totalorder %s29, 1
      %s624 = scalar_select %p623, %s29, 1
      %s625 = smul.addr %s624, 8
      %s626 = scalar_lea.vmem %s3, %s625
      %p627 = scmp.lt.s32.totalorder %s29, 1
      %s628 = scalar_select %p627, %s29, 1
      %s629 = smul.addr %s628, 8
      %s630 = scalar_lea.vmem %s4, %s629
      %p631 = scmp.lt.s32.totalorder %s29, 1
      %s632 = scalar_select %p631, %s29, 1
      %s633 = scalar_lea.vmem %s5, %s632
      %p634 = scmp.lt.s32.totalorder %s29, 1
      %s635 = scalar_select %p634, %s29, 1
      %s636 = smul.addr %s635, 8
      %s637 = smul.addr %s636, 4
      %s638 = scalar_lea.vmem %s16, %s637
      %p639 = scmp.lt.s32.totalorder %s29, 1
      %s640 = scalar_select %p639, %s29, 1
      %s641 = smul.addr %s640, 8
      %s642 = smul.addr %s641, 4
      %s643 = scalar_lea.vmem %s17, %s642
      %v645 = vld [vmem:[%s614] sm:$0xf]
      %v646 = vld [vmem:[%s614 + $0x4] sm:$0xf]
      %v647 = vld [vmem:[%s618] sm:$0xf]
      %v648 = vld [vmem:[%s622] sm:$0xf]
      %v649 = vld [vmem:[%s626] sm:$0xff]
      %v650 = vld [vmem:[%s630] sm:$0xff]
      %v651 = vld [vmem:[%s633] sm:$0x1]
      %v652 = vld [vmem:[%s6] sm:$0xf]
      %v653 = vld [vmem:[%s6 + $0x4] sm:$0xf]
      %v654 = vld [vmem:[%s6 + $0x8] sm:$0xf]
      %v655 = vld [vmem:[%s6 + $0xc] sm:$0xf]
      %v656 = vld [vmem:[%s6 + $0x10] sm:$0xf]
      %v657 = vld [vmem:[%s6 + $0x14] sm:$0xf]
      %v658 = vld [vmem:[%s6 + $0x18] sm:$0xf]
      %v659 = vld [vmem:[%s6 + $0x1c] sm:$0xf]
      %v660 = vld [vmem:[%s7] sm:$0x1]
      %v661 = vld [vmem:[%s8] sm:$0xf]
      %v662 = vld [vmem:[%s8 + $0x4] sm:$0xf]
      %v663 = vld [vmem:[%s8 + $0x8] sm:$0xf]
      %v664 = vld [vmem:[%s8 + $0xc] sm:$0xf]
      %v665 = vld [vmem:[%s8 + $0x10] sm:$0xf]
      %v666 = vld [vmem:[%s8 + $0x14] sm:$0xf]
      %v667 = vld [vmem:[%s8 + $0x18] sm:$0xf]
      %v668 = vld [vmem:[%s8 + $0x1c] sm:$0xf]
      %v669 = vld [vmem:[%s10] sm:$0xf]
      %v670 = vld [vmem:[%s10 + $0x4] sm:$0xf]
      %v671 = vld [vmem:[%s10 + $0x8] sm:$0xf]
      %v672 = vld [vmem:[%s10 + $0xc] sm:$0xf]
      %v673 = vld [vmem:[%s12] sm:$0xf]
      %v674 = vld [vmem:[%s12 + $0x4] sm:$0xf]
      %v675 = vld [vmem:[%s12 + $0x8] sm:$0xf]
      %v676 = vld [vmem:[%s12 + $0xc] sm:$0xf]
      %v677 = vld [vmem:[%s14] sm:$0xf]
      %v678 = vld [vmem:[%s14 + $0x4] sm:$0xf]
      %v679 = vld [vmem:[%s14 + $0x8] sm:$0xf]
      %v680 = vld [vmem:[%s14 + $0xc] sm:$0xf]
      %v681 = vld [vmem:[%s15] sm:$0x1]
      %v682 = vld [vmem:[%s9] sm:$0x1]
      %v684 = vlaneseq
      %v685 = vshrl.u32 %v684, 7
      %v686 = vsub.s32 0, %v685
      %v687 = vrot.slane %v682, %v686
      %v689 = vld [vmem:[%s11] sm:$0x1]
      %v691 = vlaneseq
      %v692 = vshrl.u32 %v691, 7
      %v693 = vsub.s32 0, %v692
      %v694 = vrot.slane %v689, %v693
      %v696 = vld [vmem:[%s13] sm:$0x1]
      %v698 = vlaneseq
      %v699 = vshrl.u32 %v698, 7
      %v700 = vsub.s32 0, %v699
      %v701 = vrot.slane %v696, %v700
      %704 = vset.pattern.permute.xlu0 0
      %705 = vperm.xlu0 %704, %v650
      %v706 = vpop.permute.xlu0 %705
      %v709 = vlaneseq
      %v710 = vshrl.u32 %v709, 7
      %v711 = vsub.s32 0, %v710
      %v712 = vrot.slane %v651, %v711
      %v714 = vmul.f32 %v706, %v712
      %vm715 = vcmask 130048
      %v716 = vsel %vm715, %v714, 0.0
      %717 = vadd.xlane.f32.xlu0 %v716
      %v718 = vpop.xlane.xlu0 %717
      %vm719 = vcmp.eq.f32.partialorder %v718, 0.0
      %v720 = vsel %vm719, 1.0, %v718
      %v721 = vrcp.pop %v720
      %v722 = vmul.f32 %v714, %v721
      %v724 = vlaneseq
      %v725 = vshrl.u32 %v724, 7
      %v726 = vsub.s32 0, %v725
      %v727 = vrot.slane %v681, %v726
      %v731 = vunpack.c.l.b16 %v645
      %v732 = vunpack.c.l.b16 %v646
      %v733 = vpack.c.b16 %v732, %v731
      %v738 = vunpack.c.l.b16 %v677
      %v739 = vunpack.c.l.b16 %v678
      %v740 = vunpack.c.l.b16 %v679
      %v741 = vunpack.c.l.b16 %v680
      %v742 = vpack.c.b16 %v739, %v738
      %v743 = vpack.c.b16 %v741, %v740
      %vm746 = vcmask 261120
      %v748 = vsel %vm746, %v733, 0
      %750 = vmatprep.subr.bf16.mxu0 0
      %751 = vmatpush1.bf16.msra.mxu0 %v742
      %752 = vmatprep.subr.bf16.mxu0 0
      %753 = vmatpush1.bf16.msra.mxu0 %v743
      %754 = vmatprep.subr.bf16.mxu0 0
      %755 = vmatpush1.bf16.msra.mxu0 0
      %756 = vmatprep.subr.bf16.mxu0 0
      %757 = vmatpush1.bf16.msra.mxu0 0
      %758 = vmatprep.subr.bf16.mxu0 0
      %759 = vmatpush1.bf16.msra.mxu0 0
      %760 = vmatprep.subr.bf16.mxu0 0
      %761 = vmatpush1.bf16.msra.mxu0 0
      %762 = vmatprep.subr.bf16.mxu0 0
      %763 = vmatpush1.bf16.msra.mxu0 0
      %764 = vmatprep.subr.bf16.mxu0 0
      %765 = vmatpush1.bf16.msra.mxu0 0
      %766 = vmatprep.subr.bf16.mxu0 0
      %767 = vmatpush1.bf16.msra.mxu0 0
      %768 = vmatprep.subr.bf16.mxu0 0
      %769 = vmatpush1.bf16.msra.mxu0 0
      %770 = vmatprep.subr.bf16.mxu0 0
      %771 = vmatpush1.bf16.msra.mxu0 0
      %772 = vmatprep.subr.bf16.mxu0 0
      %773 = vmatpush1.bf16.msra.mxu0 0
      %774 = vmatprep.subr.bf16.mxu0 0
      %775 = vmatpush1.bf16.msra.mxu0 0
      %776 = vmatprep.subr.bf16.mxu0 0
      %777 = vmatpush1.bf16.msra.mxu0 0
      %778 = vmatprep.subr.bf16.mxu0 0
      %779 = vmatpush1.bf16.msra.mxu0 0
      %780 = vmatprep.subr.bf16.mxu0 0
      %781 = vmatpush1.bf16.msra.mxu0 0
      %782 = vmatprep.mubr.bf16.mxu0 0
      %783 = vmatmul.mubr.bf16.gmra.mrb[0].mxu0 %v748
      %v784 = vpop.f32.mrb[0].mxu0
      %v785 = vadd.f32 %v727, %v784
      %v786 = vpop.f32.mrb[0].mxu0
      %v787 = vpop.f32.mrb[0].mxu0
      %v788 = vadd.f32 %v727, %v787
      %v789 = vpop.f32.mrb[0].mxu0
      %790 = vdwg.mxu0
      %v791 = vpack.c.bf16 %v788, %v785
      %v793 = vunpack.c.l.b16 %v648
      %v794 = vpack.c.b16 %v793, %v793
      %795 = vrot.lane.b32.xlu0 %v794, 32
      %v796 = vpop.permute.xlu0 %795
      %v799 = vsel %vm746, %v647, %v796
      %v801 = vlaneseq
      %v802 = vshrl.u32 %v801, 7
      %v803 = vsub.s32 0, %v802
      %v804 = vrot.slane %v660, %v803
      %v814 = vunpack.c.l.b16 %v652
      %v815 = vunpack.c.l.b16 %v653
      %v816 = vunpack.c.l.b16 %v654
      %v817 = vunpack.c.l.b16 %v655
      %v818 = vunpack.c.l.b16 %v656
      %v819 = vunpack.c.l.b16 %v657
      %v820 = vunpack.c.l.b16 %v658
      %v821 = vunpack.c.l.b16 %v659
      %v822 = vpack.c.b16 %v815, %v814
      %v823 = vpack.c.b16 %v817, %v816
      %v824 = vpack.c.b16 %v819, %v818
      %v825 = vpack.c.b16 %v821, %v820
      %vm830 = vcmask 523264
      %v831 = vsel %vm830, %v799, 0
      %833 = vmatprep.subr.bf16.mxu0 0
      %834 = vmatpush1.bf16.msra.mxu0 %v822
      %835 = vmatprep.subr.bf16.mxu0 0
      %836 = vmatpush1.bf16.msra.mxu0 %v823
      %837 = vmatprep.subr.bf16.mxu0 0
      %838 = vmatpush1.bf16.msra.mxu0 %v824
      %839 = vmatprep.subr.bf16.mxu0 0
      %840 = vmatpush1.bf16.msra.mxu0 %v825
      %841 = vmatprep.subr.bf16.mxu0 0
      %842 = vmatpush1.bf16.msra.mxu0 0
      %843 = vmatprep.subr.bf16.mxu0 0
      %844 = vmatpush1.bf16.msra.mxu0 0
      %845 = vmatprep.subr.bf16.mxu0 0
      %846 = vmatpush1.bf16.msra.mxu0 0
      %847 = vmatprep.subr.bf16.mxu0 0
      %848 = vmatpush1.bf16.msra.mxu0 0
      %849 = vmatprep.subr.bf16.mxu0 0
      %850 = vmatpush1.bf16.msra.mxu0 0
      %851 = vmatprep.subr.bf16.mxu0 0
      %852 = vmatpush1.bf16.msra.mxu0 0
      %853 = vmatprep.subr.bf16.mxu0 0
      %854 = vmatpush1.bf16.msra.mxu0 0
      %855 = vmatprep.subr.bf16.mxu0 0
      %856 = vmatpush1.bf16.msra.mxu0 0
      %857 = vmatprep.subr.bf16.mxu0 0
      %858 = vmatpush1.bf16.msra.mxu0 0
      %859 = vmatprep.subr.bf16.mxu0 0
      %860 = vmatpush1.bf16.msra.mxu0 0
      %861 = vmatprep.subr.bf16.mxu0 0
      %862 = vmatpush1.bf16.msra.mxu0 0
      %863 = vmatprep.subr.bf16.mxu0 0
      %864 = vmatpush1.bf16.msra.mxu0 0
      %865 = vmatprep.mubr.bf16.mxu0 0
      %866 = vmatmul.mubr.bf16.gmra.mrb[0].mxu0 %v831
      %v867 = vpop.f32.mrb[0].mxu0
      %v868 = vadd.f32 %v804, %v867
      %v869 = vpop.f32.mrb[0].mxu0
      %v870 = vpop.f32.mrb[0].mxu0
      %v871 = vpop.f32.mrb[0].mxu0
      %872 = vdwg.mxu0
      %v873 = vmax.f32 %v868, 0.0
      %875 = vset.pattern.permute.xlu0 0
      %876 = vperm.xlu0 %875, %v649
      %v877 = vpop.permute.xlu0 %876
      %v879 = vmul.f32 %v877, %v714
      %v880 = vpack.c.bf16 %v722, %v722
      %v883 = vsel %vm715, %v880, 0
      %885 = vmatprep.subr.bf16.mxu0 0
      %886 = vmatpush1.bf16.msra.mxu0 %v733
      %887 = vmatprep.subr.bf16.mxu0 0
      %888 = vmatpush1.bf16.msra.mxu0 0
      %889 = vmatprep.subr.bf16.mxu0 0
      %890 = vmatpush1.bf16.msra.mxu0 0
      %891 = vmatprep.subr.bf16.mxu0 0
      %892 = vmatpush1.bf16.msra.mxu0 0
      %893 = vmatprep.subr.bf16.mxu0 0
      %894 = vmatpush1.bf16.msra.mxu0 0
      %895 = vmatprep.subr.bf16.mxu0 0
      %896 = vmatpush1.bf16.msra.mxu0 0
      %897 = vmatprep.subr.bf16.mxu0 0
      %898 = vmatpush1.bf16.msra.mxu0 0
      %899 = vmatprep.subr.bf16.mxu0 0
      %900 = vmatpush1.bf16.msra.mxu0 0
      %901 = vmatprep.subr.bf16.mxu0 0
      %902 = vmatpush1.bf16.msra.mxu0 0
      %903 = vmatprep.subr.bf16.mxu0 0
      %904 = vmatpush1.bf16.msra.mxu0 0
      %905 = vmatprep.subr.bf16.mxu0 0
      %906 = vmatpush1.bf16.msra.mxu0 0
      %907 = vmatprep.subr.bf16.mxu0 0
      %908 = vmatpush1.bf16.msra.mxu0 0
      %909 = vmatprep.subr.bf16.mxu0 0
      %910 = vmatpush1.bf16.msra.mxu0 0
      %911 = vmatprep.subr.bf16.mxu0 0
      %912 = vmatpush1.bf16.msra.mxu0 0
      %913 = vmatprep.subr.bf16.mxu0 0
      %914 = vmatpush1.bf16.msra.mxu0 0
      %915 = vmatprep.subr.bf16.mxu0 0
      %916 = vmatpush1.bf16.msra.mxu0 0
      %917 = vmatprep.mubr.bf16.mxu0 0
      %918 = vmatmul.mubr.bf16.gmra.mrb[0].mxu0 %v883
      %v919 = vpop.f32.mrb[0].mxu0
      %v920 = vadd.f32 0.0, %v919
      %v921 = vpop.f32.mrb[0].mxu0
      %v922 = vpop.f32.mrb[0].mxu0
      %v923 = vadd.f32 0.0, %v922
      %v924 = vpop.f32.mrb[0].mxu0
      %925 = vdwg.mxu0
      %928 = vrot.lane.b32.xlu0 %v920, 32
      %v929 = vpop.permute.xlu0 %928
      %930 = vrot.lane.b32.xlu0 %v923, 32
      %v931 = vpop.permute.xlu0 %930
      %v934 = vsel %vm746, %v873, %v929
      %v935 = vsel %vm746, %v873, %v931
      %v936 = vpack.c.bf16 %v935, %v934
      %v945 = vunpack.c.l.b16 %v661
      %v946 = vunpack.c.l.b16 %v662
      %v947 = vunpack.c.l.b16 %v663
      %v948 = vunpack.c.l.b16 %v664
      %v949 = vunpack.c.l.b16 %v665
      %v950 = vunpack.c.l.b16 %v666
      %v951 = vunpack.c.l.b16 %v667
      %v952 = vunpack.c.l.b16 %v668
      %v953 = vpack.c.b16 %v946, %v945
      %v954 = vpack.c.b16 %v948, %v947
      %v955 = vpack.c.b16 %v950, %v949
      %v956 = vpack.c.b16 %v952, %v951
      %v962 = vsel %vm830, %v936, 0
      %964 = vmatprep.subr.bf16.mxu0 0
      %965 = vmatpush1.bf16.msra.mxu0 %v953
      %966 = vmatprep.subr.bf16.mxu0 0
      %967 = vmatpush1.bf16.msra.mxu0 %v954
      %968 = vmatprep.subr.bf16.mxu0 0
      %969 = vmatpush1.bf16.msra.mxu0 %v955
      %970 = vmatprep.subr.bf16.mxu0 0
      %971 = vmatpush1.bf16.msra.mxu0 %v956
      %972 = vmatprep.subr.bf16.mxu0 0
      %973 = vmatpush1.bf16.msra.mxu0 0
      %974 = vmatprep.subr.bf16.mxu0 0
      %975 = vmatpush1.bf16.msra.mxu0 0
      %976 = vmatprep.subr.bf16.mxu0 0
      %977 = vmatpush1.bf16.msra.mxu0 0
      %978 = vmatprep.subr.bf16.mxu0 0
      %979 = vmatpush1.bf16.msra.mxu0 0
      %980 = vmatprep.subr.bf16.mxu0 0
      %981 = vmatpush1.bf16.msra.mxu0 0
      %982 = vmatprep.subr.bf16.mxu0 0
      %983 = vmatpush1.bf16.msra.mxu0 0
      %984 = vmatprep.subr.bf16.mxu0 0
      %985 = vmatpush1.bf16.msra.mxu0 0
      %986 = vmatprep.subr.bf16.mxu0 0
      %987 = vmatpush1.bf16.msra.mxu0 0
      %988 = vmatprep.subr.bf16.mxu0 0
      %989 = vmatpush1.bf16.msra.mxu0 0
      %990 = vmatprep.subr.bf16.mxu0 0
      %991 = vmatpush1.bf16.msra.mxu0 0
      %992 = vmatprep.subr.bf16.mxu0 0
      %993 = vmatpush1.bf16.msra.mxu0 0
      %994 = vmatprep.subr.bf16.mxu0 0
      %995 = vmatpush1.bf16.msra.mxu0 0
      %996 = vmatprep.mubr.bf16.mxu0 0
      %997 = vmatmul.mubr.bf16.gmra.mrb[0].mxu0 %v962
      %v998 = vpop.f32.mrb[0].mxu0
      %v999 = vadd.f32 %v687, %v998
      %v1000 = vpop.f32.mrb[0].mxu0
      %v1001 = vpop.f32.mrb[0].mxu0
      %v1002 = vadd.f32 %v687, %v1001
      %v1003 = vpop.f32.mrb[0].mxu0
      %1004 = vdwg.mxu0
      %v1005 = vmax.f32 %v999, 0.0
      %v1006 = vmax.f32 %v1002, 0.0
      %v1007 = vpack.c.bf16 %v1006, %v1005
      %v1012 = vunpack.c.l.b16 %v669
      %v1013 = vunpack.c.l.b16 %v670
      %v1014 = vunpack.c.l.b16 %v671
      %v1015 = vunpack.c.l.b16 %v672
      %v1016 = vpack.c.b16 %v1013, %v1012
      %v1017 = vpack.c.b16 %v1015, %v1014
      %v1021 = vsel %vm746, %v1007, 0
      %1023 = vmatprep.subr.bf16.mxu0 0
      %1024 = vmatpush1.bf16.msra.mxu0 %v1016
      %1025 = vmatprep.subr.bf16.mxu0 0
      %1026 = vmatpush1.bf16.msra.mxu0 %v1017
      %1027 = vmatprep.subr.bf16.mxu0 0
      %1028 = vmatpush1.bf16.msra.mxu0 0
      %1029 = vmatprep.subr.bf16.mxu0 0
      %1030 = vmatpush1.bf16.msra.mxu0 0
      %1031 = vmatprep.subr.bf16.mxu0 0
      %1032 = vmatpush1.bf16.msra.mxu0 0
      %1033 = vmatprep.subr.bf16.mxu0 0
      %1034 = vmatpush1.bf16.msra.mxu0 0
      %1035 = vmatprep.subr.bf16.mxu0 0
      %1036 = vmatpush1.bf16.msra.mxu0 0
      %1037 = vmatprep.subr.bf16.mxu0 0
      %1038 = vmatpush1.bf16.msra.mxu0 0
      %1039 = vmatprep.subr.bf16.mxu0 0
      %1040 = vmatpush1.bf16.msra.mxu0 0
      %1041 = vmatprep.subr.bf16.mxu0 0
      %1042 = vmatpush1.bf16.msra.mxu0 0
      %1043 = vmatprep.subr.bf16.mxu0 0
      %1044 = vmatpush1.bf16.msra.mxu0 0
      %1045 = vmatprep.subr.bf16.mxu0 0
      %1046 = vmatpush1.bf16.msra.mxu0 0
      %1047 = vmatprep.subr.bf16.mxu0 0
      %1048 = vmatpush1.bf16.msra.mxu0 0
      %1049 = vmatprep.subr.bf16.mxu0 0
      %1050 = vmatpush1.bf16.msra.mxu0 0
      %1051 = vmatprep.subr.bf16.mxu0 0
      %1052 = vmatpush1.bf16.msra.mxu0 0
      %1053 = vmatprep.subr.bf16.mxu0 0
      %1054 = vmatpush1.bf16.msra.mxu0 0
      %1055 = vmatprep.mubr.bf16.mxu0 0
      %1056 = vmatmul.mubr.bf16.gmra.mrb[0].mxu0 %v1021
      %v1057 = vpop.f32.mrb[0].mxu0
      %v1058 = vadd.f32 %v694, %v1057
      %v1059 = vpop.f32.mrb[0].mxu0
      %v1060 = vpop.f32.mrb[0].mxu0
      %v1061 = vpop.f32.mrb[0].mxu0
      %1062 = vdwg.mxu0
      %v1064 = vrot.slane %v1007, 4
      %v1069 = vunpack.c.l.b16 %v673
      %v1070 = vunpack.c.l.b16 %v674
      %v1071 = vunpack.c.l.b16 %v675
      %v1072 = vunpack.c.l.b16 %v676
      %v1073 = vpack.c.b16 %v1070, %v1069
      %v1074 = vpack.c.b16 %v1072, %v1071
      %v1078 = vsel %vm746, %v1064, 0
      %1080 = vmatprep.subr.bf16.mxu0 0
      %1081 = vmatpush1.bf16.msra.mxu0 %v1073
      %1082 = vmatprep.subr.bf16.mxu0 0
      %1083 = vmatpush1.bf16.msra.mxu0 %v1074
      %1084 = vmatprep.subr.bf16.mxu0 0
      %1085 = vmatpush1.bf16.msra.mxu0 0
      %1086 = vmatprep.subr.bf16.mxu0 0
      %1087 = vmatpush1.bf16.msra.mxu0 0
      %1088 = vmatprep.subr.bf16.mxu0 0
      %1089 = vmatpush1.bf16.msra.mxu0 0
      %1090 = vmatprep.subr.bf16.mxu0 0
      %1091 = vmatpush1.bf16.msra.mxu0 0
      %1092 = vmatprep.subr.bf16.mxu0 0
      %1093 = vmatpush1.bf16.msra.mxu0 0
      %1094 = vmatprep.subr.bf16.mxu0 0
      %1095 = vmatpush1.bf16.msra.mxu0 0
      %1096 = vmatprep.subr.bf16.mxu0 0
      %1097 = vmatpush1.bf16.msra.mxu0 0
      %1098 = vmatprep.subr.bf16.mxu0 0
      %1099 = vmatpush1.bf16.msra.mxu0 0
      %1100 = vmatprep.subr.bf16.mxu0 0
      %1101 = vmatpush1.bf16.msra.mxu0 0
      %1102 = vmatprep.subr.bf16.mxu0 0
      %1103 = vmatpush1.bf16.msra.mxu0 0
      %1104 = vmatprep.subr.bf16.mxu0 0
      %1105 = vmatpush1.bf16.msra.mxu0 0
      %1106 = vmatprep.subr.bf16.mxu0 0
      %1107 = vmatpush1.bf16.msra.mxu0 0
      %1108 = vmatprep.subr.bf16.mxu0 0
      %1109 = vmatpush1.bf16.msra.mxu0 0
      %1110 = vmatprep.subr.bf16.mxu0 0
      %1111 = vmatpush1.bf16.msra.mxu0 0
      %1112 = vmatprep.mubr.bf16.mxu0 0
      %1113 = vmatmul.mubr.bf16.gmra.mrb[0].mxu0 %v1078
      %v1114 = vpop.f32.mrb[0].mxu0
      %v1115 = vadd.f32 %v701, %v1114
      %v1116 = vpop.f32.mrb[0].mxu0
      %v1117 = vpop.f32.mrb[0].mxu0
      %v1118 = vpop.f32.mrb[0].mxu0
      %1119 = vdwg.mxu0
      %v1120 = vpack.c.bf16 %v1058, %v1058
      %v1122 = vsel %vm746, %v1120, 0
      %v1125 = vsel %vm746, %v791, 0
      %1127 = vmatprep.subr.bf16.mxu0 0
      %1128 = vmatpush1.bf16.xpose.msra.mxu0 %v1125
      %1129 = vmatprep.subr.bf16.mxu0 0
      %1130 = vmatpush1.bf16.xpose.msra.mxu0 0
      %1131 = vmatprep.subr.bf16.mxu0 0
      %1132 = vmatpush1.bf16.xpose.msra.mxu0 0
      %1133 = vmatprep.subr.bf16.mxu0 0
      %1134 = vmatpush1.bf16.xpose.msra.mxu0 0
      %1135 = vmatprep.subr.bf16.mxu0 0
      %1136 = vmatpush1.bf16.xpose.msra.mxu0 0
      %1137 = vmatprep.subr.bf16.mxu0 0
      %1138 = vmatpush1.bf16.xpose.msra.mxu0 0
      %1139 = vmatprep.subr.bf16.mxu0 0
      %1140 = vmatpush1.bf16.xpose.msra.mxu0 0
      %1141 = vmatprep.subr.bf16.mxu0 0
      %1142 = vmatpush1.bf16.xpose.msra.mxu0 0
      %1143 = vmatprep.subr.bf16.mxu0 0
      %1144 = vmatpush1.bf16.xpose.msra.mxu0 0
      %1145 = vmatprep.subr.bf16.mxu0 0
      %1146 = vmatpush1.bf16.xpose.msra.mxu0 0
      %1147 = vmatprep.subr.bf16.mxu0 0
      %1148 = vmatpush1.bf16.xpose.msra.mxu0 0
      %1149 = vmatprep.subr.bf16.mxu0 0
      %1150 = vmatpush1.bf16.xpose.msra.mxu0 0
      %1151 = vmatprep.subr.bf16.mxu0 0
      %1152 = vmatpush1.bf16.xpose.msra.mxu0 0
      %1153 = vmatprep.subr.bf16.mxu0 0
      %1154 = vmatpush1.bf16.xpose.msra.mxu0 0
      %1155 = vmatprep.subr.bf16.mxu0 0
      %1156 = vmatpush1.bf16.xpose.msra.mxu0 0
      %1157 = vmatprep.subr.bf16.mxu0 0
      %1158 = vmatpush1.bf16.xpose.msra.mxu0 0
      %1159 = vmatprep.mubr.bf16.mxu0 0
      %1160 = vmatmul.mubr.bf16.gmra.mrb[0].mxu0 %v1122
      %v1161 = vpop.f32.mrb[0].mxu0
      %v1162 = vadd.f32 0.0, %v1161
      %v1163 = vpop.f32.mrb[0].mxu0
      %v1164 = vpop.f32.mrb[0].mxu0
      %v1165 = vpop.f32.mrb[0].mxu0
      %1166 = vdwg.mxu0
      %v1167 = vmul.f32 %v1162, 0.17677669
      %v1168 = vpack.c.bf16 %v1115, %v1115
      %1170 = vrot.lane.b32.xlu0 %v791, 96
      %v1171 = vpop.permute.xlu0 %1170
      %v1173 = vsel %vm746, %v1168, 0
      %v1176 = vsel %vm746, %v1171, 0
      %1178 = vmatprep.subr.bf16.mxu0 0
      %1179 = vmatpush1.bf16.xpose.msra.mxu0 %v1176
      %1180 = vmatprep.subr.bf16.mxu0 0
      %1181 = vmatpush1.bf16.xpose.msra.mxu0 0
      %1182 = vmatprep.subr.bf16.mxu0 0
      %1183 = vmatpush1.bf16.xpose.msra.mxu0 0
      %1184 = vmatprep.subr.bf16.mxu0 0
      %1185 = vmatpush1.bf16.xpose.msra.mxu0 0
      %1186 = vmatprep.subr.bf16.mxu0 0
      %1187 = vmatpush1.bf16.xpose.msra.mxu0 0
      %1188 = vmatprep.subr.bf16.mxu0 0
      %1189 = vmatpush1.bf16.xpose.msra.mxu0 0
      %1190 = vmatprep.subr.bf16.mxu0 0
      %1191 = vmatpush1.bf16.xpose.msra.mxu0 0
      %1192 = vmatprep.subr.bf16.mxu0 0
      %1193 = vmatpush1.bf16.xpose.msra.mxu0 0
      %1194 = vmatprep.subr.bf16.mxu0 0
      %1195 = vmatpush1.bf16.xpose.msra.mxu0 0
      %1196 = vmatprep.subr.bf16.mxu0 0
      %1197 = vmatpush1.bf16.xpose.msra.mxu0 0
      %1198 = vmatprep.subr.bf16.mxu0 0
      %1199 = vmatpush1.bf16.xpose.msra.mxu0 0
      %1200 = vmatprep.subr.bf16.mxu0 0
      %1201 = vmatpush1.bf16.xpose.msra.mxu0 0
      %1202 = vmatprep.subr.bf16.mxu0 0
      %1203 = vmatpush1.bf16.xpose.msra.mxu0 0
      %1204 = vmatprep.subr.bf16.mxu0 0
      %1205 = vmatpush1.bf16.xpose.msra.mxu0 0
      %1206 = vmatprep.subr.bf16.mxu0 0
      %1207 = vmatpush1.bf16.xpose.msra.mxu0 0
      %1208 = vmatprep.subr.bf16.mxu0 0
      %1209 = vmatpush1.bf16.xpose.msra.mxu0 0
      %1210 = vmatprep.mubr.bf16.mxu0 0
      %1211 = vmatmul.mubr.bf16.gmra.mrb[0].mxu0 %v1173
      %v1212 = vpop.f32.mrb[0].mxu0
      %v1213 = vadd.f32 0.0, %v1212
      %v1214 = vpop.f32.mrb[0].mxu0
      %v1215 = vpop.f32.mrb[0].mxu0
      %v1216 = vpop.f32.mrb[0].mxu0
      %1217 = vdwg.mxu0
      %v1218 = vmul.f32 %v1213, 0.17677669
      %vm1219 = vcmp.gt.f32.partialorder %v879, 0.0
      %v1220 = vsel %vm1219, %v1167, -1e+18
      %v1221 = vsel %vm1219, %v1218, -1e+18
      %v1222 = vsel %vm715, %v1220, -inf
      %1223 = vmax.xlane.f32.xlu0 %v1222
      %v1224 = vpop.xlane.xlu0 %1223
      %v1225 = vsub.f32 %v1220, %v1224
      %v1226 = vmul.f32 %v1225, 1.442695
      %v1227 = vpow.pop %v1226
      %v1228 = vsel %vm715, %v1227, 0.0
      %1229 = vadd.xlane.f32.xlu0 %v1228
      %v1230 = vpop.xlane.xlu0 %1229
      %v1231 = vrcp.pop %v1230
      %v1232 = vmul.f32 %v1227, %v1231
      %v1233 = vsel %vm715, %v1221, -inf
      %1234 = vmax.xlane.f32.xlu0 %v1233
      %v1235 = vpop.xlane.xlu0 %1234
      %v1236 = vsub.f32 %v1221, %v1235
      %v1237 = vmul.f32 %v1236, 1.442695
      %v1238 = vpow.pop %v1237
      %v1239 = vsel %vm715, %v1238, 0.0
      %1240 = vadd.xlane.f32.xlu0 %v1239
      %v1241 = vpop.xlane.xlu0 %1240
      %v1242 = vrcp.pop %v1241
      %v1243 = vmul.f32 %v1238, %v1242
      %v1245 = vcombine.high %v1232, %v1232
      %v1247 = vunpack.c.l.s4 1966171168
      %v1248 = vunpack.c.0.s8 %v1247
      %v1249 = vlaneseq
      %v1250 = vshrl.u32 %v1249, 7
      %v1251 = vsub.s32 %v1248, %v1250
      %v1252 = vrot.slane %v1232, %v1251
      %v1254 = vunpack.c.l.s4 1966171168
      %v1255 = vunpack.c.0.s8 %v1254
      %v1256 = vlaneseq
      %v1257 = vshrl.u32 %v1256, 7
      %v1258 = vsub.s32 %v1255, %v1257
      %v1259 = vrot.slane %v1245, %v1258
      %v1260 = vcombine.high %v1252, %v1252
      %v1261 = vcombine.high %v1259, %v1259
      %v1263 = vunpack.c.l.s4 1966171168
      %v1264 = vunpack.c.0.s8 %v1263
      %v1265 = vlaneseq
      %v1266 = vshrl.u32 %v1265, 7
      %v1267 = vsub.s32 %v1264, %v1266
      %v1268 = vrot.slane %v1252, %v1267
      %v1270 = vunpack.c.l.s4 1966171168
      %v1271 = vunpack.c.0.s8 %v1270
      %v1272 = vlaneseq
      %v1273 = vshrl.u32 %v1272, 7
      %v1274 = vsub.s32 %v1271, %v1273
      %v1275 = vrot.slane %v1259, %v1274
      %v1277 = vunpack.c.l.s4 1966171168
      %v1278 = vunpack.c.0.s8 %v1277
      %v1279 = vlaneseq
      %v1280 = vshrl.u32 %v1279, 7
      %v1281 = vsub.s32 %v1278, %v1280
      %v1282 = vrot.slane %v1260, %v1281
      %v1284 = vunpack.c.l.s4 1966171168
      %v1285 = vunpack.c.0.s8 %v1284
      %v1286 = vlaneseq
      %v1287 = vshrl.u32 %v1286, 7
      %v1288 = vsub.s32 %v1285, %v1287
      %v1289 = vrot.slane %v1261, %v1288
      %v1290 = vcombine.high %v1268, %v1268
      %v1291 = vcombine.high %v1275, %v1275
      %v1292 = vcombine.high %v1282, %v1282
      %v1293 = vcombine.high %v1289, %v1289
      %vm1302 = vcmask 122880
      %1303 = vst.msk [vmem:[%s638] sm:$0x1] %vm1302, %v1268
      %1304 = vst.msk [vmem:[%s638 + $0x4] sm:$0x1] %vm1302, %v1282
      %1305 = vst.msk [vmem:[%s638 + $0x8] sm:$0x1] %vm1302, %v1290
      %1306 = vst.msk [vmem:[%s638 + $0xc] sm:$0x1] %vm1302, %v1292
      %1307 = vst.msk [vmem:[%s638 + $0x10] sm:$0x1] %vm1302, %v1275
      %1308 = vst.msk [vmem:[%s638 + $0x14] sm:$0x1] %vm1302, %v1289
      %1309 = vst.msk [vmem:[%s638 + $0x18] sm:$0x1] %vm1302, %v1291
      %1310 = vst.msk [vmem:[%s638 + $0x1c] sm:$0x1] %vm1302, %v1293
      %v1312 = vcombine.high %v1243, %v1243
      %v1314 = vunpack.c.l.s4 1966171168
      %v1315 = vunpack.c.0.s8 %v1314
      %v1316 = vlaneseq
      %v1317 = vshrl.u32 %v1316, 7
      %v1318 = vsub.s32 %v1315, %v1317
      %v1319 = vrot.slane %v1243, %v1318
      %v1321 = vunpack.c.l.s4 1966171168
      %v1322 = vunpack.c.0.s8 %v1321
      %v1323 = vlaneseq
      %v1324 = vshrl.u32 %v1323, 7
      %v1325 = vsub.s32 %v1322, %v1324
      %v1326 = vrot.slane %v1312, %v1325
      %v1327 = vcombine.high %v1319, %v1319
      %v1328 = vcombine.high %v1326, %v1326
      %v1330 = vunpack.c.l.s4 1966171168
      %v1331 = vunpack.c.0.s8 %v1330
      %v1332 = vlaneseq
      %v1333 = vshrl.u32 %v1332, 7
      %v1334 = vsub.s32 %v1331, %v1333
      %v1335 = vrot.slane %v1319, %v1334
      %v1337 = vunpack.c.l.s4 1966171168
      %v1338 = vunpack.c.0.s8 %v1337
      %v1339 = vlaneseq
      %v1340 = vshrl.u32 %v1339, 7
      %v1341 = vsub.s32 %v1338, %v1340
      %v1342 = vrot.slane %v1326, %v1341
      %v1344 = vunpack.c.l.s4 1966171168
      %v1345 = vunpack.c.0.s8 %v1344
      %v1346 = vlaneseq
      %v1347 = vshrl.u32 %v1346, 7
      %v1348 = vsub.s32 %v1345, %v1347
      %v1349 = vrot.slane %v1327, %v1348
      %v1351 = vunpack.c.l.s4 1966171168
      %v1352 = vunpack.c.0.s8 %v1351
      %v1353 = vlaneseq
      %v1354 = vshrl.u32 %v1353, 7
      %v1355 = vsub.s32 %v1352, %v1354
      %v1356 = vrot.slane %v1328, %v1355
      %v1357 = vcombine.high %v1335, %v1335
      %v1358 = vcombine.high %v1342, %v1342
      %v1359 = vcombine.high %v1349, %v1349
      %v1360 = vcombine.high %v1356, %v1356
      %1369 = vst.msk [vmem:[%s643] sm:$0x1] %vm1302, %v1335
      %1370 = vst.msk [vmem:[%s643 + $0x4] sm:$0x1] %vm1302, %v1349
      %1371 = vst.msk [vmem:[%s643 + $0x8] sm:$0x1] %vm1302, %v1357
      %1372 = vst.msk [vmem:[%s643 + $0xc] sm:$0x1] %vm1302, %v1359
      %1373 = vst.msk [vmem:[%s643 + $0x10] sm:$0x1] %vm1302, %v1342
      %1374 = vst.msk [vmem:[%s643 + $0x14] sm:$0x1] %vm1302, %v1356
      %1375 = vst.msk [vmem:[%s643 + $0x18] sm:$0x1] %vm1302, %v1358
      %1376 = vst.msk [vmem:[%s643 + $0x1c] sm:$0x1] %vm1302, %v1360
      %1377 = vset.pattern.permute.xlu0 1
      %1378 = vperm.xlu0 %1377, %v649
      %v1379 = vpop.permute.xlu0 %1378
      %v1381 = vmul.f32 %v1379, %v714
      %v1382 = vpack.c.bf16 %v1243, %v1232
      %v1384 = vsel %vm715, %v1382, 0
      %1386 = vmatprep.subr.bf16.mxu0 0
      %1387 = vmatpush1.bf16.msra.mxu0 %v733
      %1388 = vmatprep.subr.bf16.mxu0 0
      %1389 = vmatpush1.bf16.msra.mxu0 0
      %1390 = vmatprep.subr.bf16.mxu0 0
      %1391 = vmatpush1.bf16.msra.mxu0 0
      %1392 = vmatprep.subr.bf16.mxu0 0
      %1393 = vmatpush1.bf16.msra.mxu0 0
      %1394 = vmatprep.subr.bf16.mxu0 0
      %1395 = vmatpush1.bf16.msra.mxu0 0
      %1396 = vmatprep.subr.bf16.mxu0 0
      %1397 = vmatpush1.bf16.msra.mxu0 0
      %1398 = vmatprep.subr.bf16.mxu0 0
      %1399 = vmatpush1.bf16.msra.mxu0 0
      %1400 = vmatprep.subr.bf16.mxu0 0
      %1401 = vmatpush1.bf16.msra.mxu0 0
      %1402 = vmatprep.subr.bf16.mxu0 0
      %1403 = vmatpush1.bf16.msra.mxu0 0
      %1404 = vmatprep.subr.bf16.mxu0 0
      %1405 = vmatpush1.bf16.msra.mxu0 0
      %1406 = vmatprep.subr.bf16.mxu0 0
      %1407 = vmatpush1.bf16.msra.mxu0 0
      %1408 = vmatprep.subr.bf16.mxu0 0
      %1409 = vmatpush1.bf16.msra.mxu0 0
      %1410 = vmatprep.subr.bf16.mxu0 0
      %1411 = vmatpush1.bf16.msra.mxu0 0
      %1412 = vmatprep.subr.bf16.mxu0 0
      %1413 = vmatpush1.bf16.msra.mxu0 0
      %1414 = vmatprep.subr.bf16.mxu0 0
      %1415 = vmatpush1.bf16.msra.mxu0 0
      %1416 = vmatprep.subr.bf16.mxu0 0
      %1417 = vmatpush1.bf16.msra.mxu0 0
      %1418 = vmatprep.mubr.bf16.mxu0 0
      %1419 = vmatmul.mubr.bf16.gmra.mrb[0].mxu0 %v1384
      %v1420 = vpop.f32.mrb[0].mxu0
      %v1421 = vadd.f32 0.0, %v1420
      %v1422 = vpop.f32.mrb[0].mxu0
      %v1423 = vpop.f32.mrb[0].mxu0
      %v1424 = vadd.f32 0.0, %v1423
      %v1425 = vpop.f32.mrb[0].mxu0
      %1426 = vdwg.mxu0
      %1429 = vrot.lane.b32.xlu0 %v1421, 32
      %v1430 = vpop.permute.xlu0 %1429
      %1431 = vrot.lane.b32.xlu0 %v1424, 32
      %v1432 = vpop.permute.xlu0 %1431
      %v1435 = vsel %vm746, %v1005, %v1430
      %v1436 = vsel %vm746, %v1006, %v1432
      %v1437 = vpack.c.bf16 %v1436, %v1435
      %v1439 = vsel %vm830, %v1437, 0
      %1441 = vmatprep.subr.bf16.mxu0 0
      %1442 = vmatpush1.bf16.msra.mxu0 %v953
      %1443 = vmatprep.subr.bf16.mxu0 0
      %1444 = vmatpush1.bf16.msra.mxu0 %v954
      %1445 = vmatprep.subr.bf16.mxu0 0
      %1446 = vmatpush1.bf16.msra.mxu0 %v955
      %1447 = vmatprep.subr.bf16.mxu0 0
      %1448 = vmatpush1.bf16.msra.mxu0 %v956
      %1449 = vmatprep.subr.bf16.mxu0 0
      %1450 = vmatpush1.bf16.msra.mxu0 0
      %1451 = vmatprep.subr.bf16.mxu0 0
      %1452 = vmatpush1.bf16.msra.mxu0 0
      %1453 = vmatprep.subr.bf16.mxu0 0
      %1454 = vmatpush1.bf16.msra.mxu0 0
      %1455 = vmatprep.subr.bf16.mxu0 0
      %1456 = vmatpush1.bf16.msra.mxu0 0
      %1457 = vmatprep.subr.bf16.mxu0 0
      %1458 = vmatpush1.bf16.msra.mxu0 0
      %1459 = vmatprep.subr.bf16.mxu0 0
      %1460 = vmatpush1.bf16.msra.mxu0 0
      %1461 = vmatprep.subr.bf16.mxu0 0
      %1462 = vmatpush1.bf16.msra.mxu0 0
      %1463 = vmatprep.subr.bf16.mxu0 0
      %1464 = vmatpush1.bf16.msra.mxu0 0
      %1465 = vmatprep.subr.bf16.mxu0 0
      %1466 = vmatpush1.bf16.msra.mxu0 0
      %1467 = vmatprep.subr.bf16.mxu0 0
      %1468 = vmatpush1.bf16.msra.mxu0 0
      %1469 = vmatprep.subr.bf16.mxu0 0
      %1470 = vmatpush1.bf16.msra.mxu0 0
      %1471 = vmatprep.subr.bf16.mxu0 0
      %1472 = vmatpush1.bf16.msra.mxu0 0
      %1473 = vmatprep.mubr.bf16.mxu0 0
      %1474 = vmatmul.mubr.bf16.gmra.mrb[0].mxu0 %v1439
      %v1475 = vpop.f32.mrb[0].mxu0
      %v1476 = vadd.f32 %v687, %v1475
      %v1477 = vpop.f32.mrb[0].mxu0
      %v1478 = vpop.f32.mrb[0].mxu0
      %v1479 = vadd.f32 %v687, %v1478
      %v1480 = vpop.f32.mrb[0].mxu0
      %1481 = vdwg.mxu0
      %v1482 = vmax.f32 %v1476, 0.0
      %v1483 = vmax.f32 %v1479, 0.0
      %v1484 = vpack.c.bf16 %v1483, %v1482
      %v1486 = vsel %vm746, %v1484, 0
      %1488 = vmatprep.subr.bf16.mxu0 0
      %1489 = vmatpush1.bf16.msra.mxu0 %v1016
      %1490 = vmatprep.subr.bf16.mxu0 0
      %1491 = vmatpush1.bf16.msra.mxu0 %v1017
      %1492 = vmatprep.subr.bf16.mxu0 0
      %1493 = vmatpush1.bf16.msra.mxu0 0
      %1494 = vmatprep.subr.bf16.mxu0 0
      %1495 = vmatpush1.bf16.msra.mxu0 0
      %1496 = vmatprep.subr.bf16.mxu0 0
      %1497 = vmatpush1.bf16.msra.mxu0 0
      %1498 = vmatprep.subr.bf16.mxu0 0
      %1499 = vmatpush1.bf16.msra.mxu0 0
      %1500 = vmatprep.subr.bf16.mxu0 0
      %1501 = vmatpush1.bf16.msra.mxu0 0
      %1502 = vmatprep.subr.bf16.mxu0 0
      %1503 = vmatpush1.bf16.msra.mxu0 0
      %1504 = vmatprep.subr.bf16.mxu0 0
      %1505 = vmatpush1.bf16.msra.mxu0 0
      %1506 = vmatprep.subr.bf16.mxu0 0
      %1507 = vmatpush1.bf16.msra.mxu0 0
      %1508 = vmatprep.subr.bf16.mxu0 0
      %1509 = vmatpush1.bf16.msra.mxu0 0
      %1510 = vmatprep.subr.bf16.mxu0 0
      %1511 = vmatpush1.bf16.msra.mxu0 0
      %1512 = vmatprep.subr.bf16.mxu0 0
      %1513 = vmatpush1.bf16.msra.mxu0 0
      %1514 = vmatprep.subr.bf16.mxu0 0
      %1515 = vmatpush1.bf16.msra.mxu0 0
      %1516 = vmatprep.subr.bf16.mxu0 0
      %1517 = vmatpush1.bf16.msra.mxu0 0
      %1518 = vmatprep.subr.bf16.mxu0 0
      %1519 = vmatpush1.bf16.msra.mxu0 0
      %1520 = vmatprep.mubr.bf16.mxu0 0
      %1521 = vmatmul.mubr.bf16.gmra.mrb[0].mxu0 %v1486
      %v1522 = vpop.f32.mrb[0].mxu0
      %v1523 = vadd.f32 %v694, %v1522
      %v1524 = vpop.f32.mrb[0].mxu0
      %v1525 = vpop.f32.mrb[0].mxu0
      %v1526 = vpop.f32.mrb[0].mxu0
      %1527 = vdwg.mxu0
      %v1529 = vrot.slane %v1484, 4
      %v1531 = vsel %vm746, %v1529, 0
      %1533 = vmatprep.subr.bf16.mxu0 0
      %1534 = vmatpush1.bf16.msra.mxu0 %v1073
      %1535 = vmatprep.subr.bf16.mxu0 0
      %1536 = vmatpush1.bf16.msra.mxu0 %v1074
      %1537 = vmatprep.subr.bf16.mxu0 0
      %1538 = vmatpush1.bf16.msra.mxu0 0
      %1539 = vmatprep.subr.bf16.mxu0 0
      %1540 = vmatpush1.bf16.msra.mxu0 0
      %1541 = vmatprep.subr.bf16.mxu0 0
      %1542 = vmatpush1.bf16.msra.mxu0 0
      %1543 = vmatprep.subr.bf16.mxu0 0
      %1544 = vmatpush1.bf16.msra.mxu0 0
      %1545 = vmatprep.subr.bf16.mxu0 0
      %1546 = vmatpush1.bf16.msra.mxu0 0
      %1547 = vmatprep.subr.bf16.mxu0 0
      %1548 = vmatpush1.bf16.msra.mxu0 0
      %1549 = vmatprep.subr.bf16.mxu0 0
      %1550 = vmatpush1.bf16.msra.mxu0 0
      %1551 = vmatprep.subr.bf16.mxu0 0
      %1552 = vmatpush1.bf16.msra.mxu0 0
      %1553 = vmatprep.subr.bf16.mxu0 0
      %1554 = vmatpush1.bf16.msra.mxu0 0
      %1555 = vmatprep.subr.bf16.mxu0 0
      %1556 = vmatpush1.bf16.msra.mxu0 0
      %1557 = vmatprep.subr.bf16.mxu0 0
      %1558 = vmatpush1.bf16.msra.mxu0 0
      %1559 = vmatprep.subr.bf16.mxu0 0
      %1560 = vmatpush1.bf16.msra.mxu0 0
      %1561 = vmatprep.subr.bf16.mxu0 0
      %1562 = vmatpush1.bf16.msra.mxu0 0
      %1563 = vmatprep.subr.bf16.mxu0 0
      %1564 = vmatpush1.bf16.msra.mxu0 0
      %1565 = vmatprep.mubr.bf16.mxu0 0
      %1566 = vmatmul.mubr.bf16.gmra.mrb[0].mxu0 %v1531
      %v1567 = vpop.f32.mrb[0].mxu0
      %v1568 = vadd.f32 %v701, %v1567
      %v1569 = vpop.f32.mrb[0].mxu0
      %v1570 = vpop.f32.mrb[0].mxu0
      %v1571 = vpop.f32.mrb[0].mxu0
      %1572 = vdwg.mxu0
      %v1573 = vpack.c.bf16 %v1523, %v1523
      %v1575 = vsel %vm746, %v1573, 0
      %1577 = vmatprep.subr.bf16.mxu0 0
      %1578 = vmatpush1.bf16.xpose.msra.mxu0 %v1125
      %1579 = vmatprep.subr.bf16.mxu0 0
      %1580 = vmatpush1.bf16.xpose.msra.mxu0 0
      %1581 = vmatprep.subr.bf16.mxu0 0
      %1582 = vmatpush1.bf16.xpose.msra.mxu0 0
      %1583 = vmatprep.subr.bf16.mxu0 0
      %1584 = vmatpush1.bf16.xpose.msra.mxu0 0
      %1585 = vmatprep.subr.bf16.mxu0 0
      %1586 = vmatpush1.bf16.xpose.msra.mxu0 0
      %1587 = vmatprep.subr.bf16.mxu0 0
      %1588 = vmatpush1.bf16.xpose.msra.mxu0 0
      %1589 = vmatprep.subr.bf16.mxu0 0
      %1590 = vmatpush1.bf16.xpose.msra.mxu0 0
      %1591 = vmatprep.subr.bf16.mxu0 0
      %1592 = vmatpush1.bf16.xpose.msra.mxu0 0
      %1593 = vmatprep.subr.bf16.mxu0 0
      %1594 = vmatpush1.bf16.xpose.msra.mxu0 0
      %1595 = vmatprep.subr.bf16.mxu0 0
      %1596 = vmatpush1.bf16.xpose.msra.mxu0 0
      %1597 = vmatprep.subr.bf16.mxu0 0
      %1598 = vmatpush1.bf16.xpose.msra.mxu0 0
      %1599 = vmatprep.subr.bf16.mxu0 0
      %1600 = vmatpush1.bf16.xpose.msra.mxu0 0
      %1601 = vmatprep.subr.bf16.mxu0 0
      %1602 = vmatpush1.bf16.xpose.msra.mxu0 0
      %1603 = vmatprep.subr.bf16.mxu0 0
      %1604 = vmatpush1.bf16.xpose.msra.mxu0 0
      %1605 = vmatprep.subr.bf16.mxu0 0
      %1606 = vmatpush1.bf16.xpose.msra.mxu0 0
      %1607 = vmatprep.subr.bf16.mxu0 0
      %1608 = vmatpush1.bf16.xpose.msra.mxu0 0
      %1609 = vmatprep.mubr.bf16.mxu0 0
      %1610 = vmatmul.mubr.bf16.gmra.mrb[0].mxu0 %v1575
      %v1611 = vpop.f32.mrb[0].mxu0
      %v1612 = vadd.f32 0.0, %v1611
      %v1613 = vpop.f32.mrb[0].mxu0
      %v1614 = vpop.f32.mrb[0].mxu0
      %v1615 = vpop.f32.mrb[0].mxu0
      %1616 = vdwg.mxu0
      %v1617 = vmul.f32 %v1612, 0.17677669
      %v1618 = vpack.c.bf16 %v1568, %v1568
      %v1620 = vsel %vm746, %v1618, 0
      %1622 = vmatprep.subr.bf16.mxu0 0
      %1623 = vmatpush1.bf16.xpose.msra.mxu0 %v1176
      %1624 = vmatprep.subr.bf16.mxu0 0
      %1625 = vmatpush1.bf16.xpose.msra.mxu0 0
      %1626 = vmatprep.subr.bf16.mxu0 0
      %1627 = vmatpush1.bf16.xpose.msra.mxu0 0
      %1628 = vmatprep.subr.bf16.mxu0 0
      %1629 = vmatpush1.bf16.xpose.msra.mxu0 0
      %1630 = vmatprep.subr.bf16.mxu0 0
      %1631 = vmatpush1.bf16.xpose.msra.mxu0 0
      %1632 = vmatprep.subr.bf16.mxu0 0
      %1633 = vmatpush1.bf16.xpose.msra.mxu0 0
      %1634 = vmatprep.subr.bf16.mxu0 0
      %1635 = vmatpush1.bf16.xpose.msra.mxu0 0
      %1636 = vmatprep.subr.bf16.mxu0 0
      %1637 = vmatpush1.bf16.xpose.msra.mxu0 0
      %1638 = vmatprep.subr.bf16.mxu0 0
      %1639 = vmatpush1.bf16.xpose.msra.mxu0 0
      %1640 = vmatprep.subr.bf16.mxu0 0
      %1641 = vmatpush1.bf16.xpose.msra.mxu0 0
      %1642 = vmatprep.subr.bf16.mxu0 0
      %1643 = vmatpush1.bf16.xpose.msra.mxu0 0
      %1644 = vmatprep.subr.bf16.mxu0 0
      %1645 = vmatpush1.bf16.xpose.msra.mxu0 0
      %1646 = vmatprep.subr.bf16.mxu0 0
      %1647 = vmatpush1.bf16.xpose.msra.mxu0 0
      %1648 = vmatprep.subr.bf16.mxu0 0
      %1649 = vmatpush1.bf16.xpose.msra.mxu0 0
      %1650 = vmatprep.subr.bf16.mxu0 0
      %1651 = vmatpush1.bf16.xpose.msra.mxu0 0
      %1652 = vmatprep.subr.bf16.mxu0 0
      %1653 = vmatpush1.bf16.xpose.msra.mxu0 0
      %1654 = vmatprep.mubr.bf16.mxu0 0
      %1655 = vmatmul.mubr.bf16.gmra.mrb[0].mxu0 %v1620
      %v1656 = vpop.f32.mrb[0].mxu0
      %v1657 = vadd.f32 0.0, %v1656
      %v1658 = vpop.f32.mrb[0].mxu0
      %v1659 = vpop.f32.mrb[0].mxu0
      %v1660 = vpop.f32.mrb[0].mxu0
      %1661 = vdwg.mxu0
      %v1662 = vmul.f32 %v1657, 0.17677669
      %vm1663 = vcmp.gt.f32.partialorder %v1381, 0.0
      %v1664 = vsel %vm1663, %v1617, -1e+18
      %v1665 = vsel %vm1663, %v1662, -1e+18
      %v1666 = vsel %vm715, %v1664, -inf
      %1667 = vmax.xlane.f32.xlu0 %v1666
      %v1668 = vpop.xlane.xlu0 %1667
      %v1669 = vsub.f32 %v1664, %v1668
      %v1670 = vmul.f32 %v1669, 1.442695
      %v1671 = vpow.pop %v1670
      %v1672 = vsel %vm715, %v1671, 0.0
      %1673 = vadd.xlane.f32.xlu0 %v1672
      %v1674 = vpop.xlane.xlu0 %1673
      %v1675 = vrcp.pop %v1674
      %v1676 = vmul.f32 %v1671, %v1675
      %v1677 = vsel %vm715, %v1665, -inf
      %1678 = vmax.xlane.f32.xlu0 %v1677
      %v1679 = vpop.xlane.xlu0 %1678
      %v1680 = vsub.f32 %v1665, %v1679
      %v1681 = vmul.f32 %v1680, 1.442695
      %v1682 = vpow.pop %v1681
      %v1683 = vsel %vm715, %v1682, 0.0
      %1684 = vadd.xlane.f32.xlu0 %v1683
      %v1685 = vpop.xlane.xlu0 %1684
      %v1686 = vrcp.pop %v1685
      %v1687 = vmul.f32 %v1682, %v1686
      %v1689 = vcombine.high %v1676, %v1676
      %v1691 = vunpack.c.l.s4 1966171168
      %v1692 = vunpack.c.0.s8 %v1691
      %v1693 = vlaneseq
      %v1694 = vshrl.u32 %v1693, 7
      %v1695 = vsub.s32 %v1692, %v1694
      %v1696 = vrot.slane %v1676, %v1695
      %v1698 = vunpack.c.l.s4 1966171168
      %v1699 = vunpack.c.0.s8 %v1698
      %v1700 = vlaneseq
      %v1701 = vshrl.u32 %v1700, 7
      %v1702 = vsub.s32 %v1699, %v1701
      %v1703 = vrot.slane %v1689, %v1702
      %v1704 = vcombine.high %v1696, %v1696
      %v1705 = vcombine.high %v1703, %v1703
      %v1707 = vunpack.c.l.s4 1966171168
      %v1708 = vunpack.c.0.s8 %v1707
      %v1709 = vlaneseq
      %v1710 = vshrl.u32 %v1709, 7
      %v1711 = vsub.s32 %v1708, %v1710
      %v1712 = vrot.slane %v1696, %v1711
      %v1714 = vunpack.c.l.s4 1966171168
      %v1715 = vunpack.c.0.s8 %v1714
      %v1716 = vlaneseq
      %v1717 = vshrl.u32 %v1716, 7
      %v1718 = vsub.s32 %v1715, %v1717
      %v1719 = vrot.slane %v1703, %v1718
      %v1721 = vunpack.c.l.s4 1966171168
      %v1722 = vunpack.c.0.s8 %v1721
      %v1723 = vlaneseq
      %v1724 = vshrl.u32 %v1723, 7
      %v1725 = vsub.s32 %v1722, %v1724
      %v1726 = vrot.slane %v1704, %v1725
      %v1728 = vunpack.c.l.s4 1966171168
      %v1729 = vunpack.c.0.s8 %v1728
      %v1730 = vlaneseq
      %v1731 = vshrl.u32 %v1730, 7
      %v1732 = vsub.s32 %v1729, %v1731
      %v1733 = vrot.slane %v1705, %v1732
      %v1734 = vcombine.high %v1712, %v1712
      %v1735 = vcombine.high %v1719, %v1719
      %v1736 = vcombine.high %v1726, %v1726
      %v1737 = vcombine.high %v1733, %v1733
      %1746 = vst.msk [vmem:[%s638 + $0x1] sm:$0x1] %vm1302, %v1712
      %1747 = vst.msk [vmem:[%s638 + $0x5] sm:$0x1] %vm1302, %v1726
      %1748 = vst.msk [vmem:[%s638 + $0x9] sm:$0x1] %vm1302, %v1734
      %1749 = vst.msk [vmem:[%s638 + $0xd] sm:$0x1] %vm1302, %v1736
      %1750 = vst.msk [vmem:[%s638 + $0x11] sm:$0x1] %vm1302, %v1719
      %1751 = vst.msk [vmem:[%s638 + $0x15] sm:$0x1] %vm1302, %v1733
      %1752 = vst.msk [vmem:[%s638 + $0x19] sm:$0x1] %vm1302, %v1735
      %1753 = vst.msk [vmem:[%s638 + $0x1d] sm:$0x1] %vm1302, %v1737
      %v1755 = vcombine.high %v1687, %v1687
      %v1757 = vunpack.c.l.s4 1966171168
      %v1758 = vunpack.c.0.s8 %v1757
      %v1759 = vlaneseq
      %v1760 = vshrl.u32 %v1759, 7
      %v1761 = vsub.s32 %v1758, %v1760
      %v1762 = vrot.slane %v1687, %v1761
      %v1764 = vunpack.c.l.s4 1966171168
      %v1765 = vunpack.c.0.s8 %v1764
      %v1766 = vlaneseq
      %v1767 = vshrl.u32 %v1766, 7
      %v1768 = vsub.s32 %v1765, %v1767
      %v1769 = vrot.slane %v1755, %v1768
      %v1770 = vcombine.high %v1762, %v1762
      %v1771 = vcombine.high %v1769, %v1769
      %v1773 = vunpack.c.l.s4 1966171168
      %v1774 = vunpack.c.0.s8 %v1773
      %v1775 = vlaneseq
      %v1776 = vshrl.u32 %v1775, 7
      %v1777 = vsub.s32 %v1774, %v1776
      %v1778 = vrot.slane %v1762, %v1777
      %v1780 = vunpack.c.l.s4 1966171168
      %v1781 = vunpack.c.0.s8 %v1780
      %v1782 = vlaneseq
      %v1783 = vshrl.u32 %v1782, 7
      %v1784 = vsub.s32 %v1781, %v1783
      %v1785 = vrot.slane %v1769, %v1784
      %v1787 = vunpack.c.l.s4 1966171168
      %v1788 = vunpack.c.0.s8 %v1787
      %v1789 = vlaneseq
      %v1790 = vshrl.u32 %v1789, 7
      %v1791 = vsub.s32 %v1788, %v1790
      %v1792 = vrot.slane %v1770, %v1791
      %v1794 = vunpack.c.l.s4 1966171168
      %v1795 = vunpack.c.0.s8 %v1794
      %v1796 = vlaneseq
      %v1797 = vshrl.u32 %v1796, 7
      %v1798 = vsub.s32 %v1795, %v1797
      %v1799 = vrot.slane %v1771, %v1798
      %v1800 = vcombine.high %v1778, %v1778
      %v1801 = vcombine.high %v1785, %v1785
      %v1802 = vcombine.high %v1792, %v1792
      %v1803 = vcombine.high %v1799, %v1799
      %1812 = vst.msk [vmem:[%s643 + $0x1] sm:$0x1] %vm1302, %v1778
      %1813 = vst.msk [vmem:[%s643 + $0x5] sm:$0x1] %vm1302, %v1792
      %1814 = vst.msk [vmem:[%s643 + $0x9] sm:$0x1] %vm1302, %v1800
      %1815 = vst.msk [vmem:[%s643 + $0xd] sm:$0x1] %vm1302, %v1802
      %1816 = vst.msk [vmem:[%s643 + $0x11] sm:$0x1] %vm1302, %v1785
      %1817 = vst.msk [vmem:[%s643 + $0x15] sm:$0x1] %vm1302, %v1799
      %1818 = vst.msk [vmem:[%s643 + $0x19] sm:$0x1] %vm1302, %v1801
      %1819 = vst.msk [vmem:[%s643 + $0x1d] sm:$0x1] %vm1302, %v1803
      %1820 = vset.pattern.permute.xlu0 2
      %1821 = vperm.xlu0 %1820, %v649
      %v1822 = vpop.permute.xlu0 %1821
      %v1824 = vmul.f32 %v1822, %v714
      %v1825 = vpack.c.bf16 %v1687, %v1676
      %v1827 = vsel %vm715, %v1825, 0
      %1829 = vmatprep.subr.bf16.mxu0 0
      %1830 = vmatpush1.bf16.msra.mxu0 %v733
      %1831 = vmatprep.subr.bf16.mxu0 0
      %1832 = vmatpush1.bf16.msra.mxu0 0
      %1833 = vmatprep.subr.bf16.mxu0 0
      %1834 = vmatpush1.bf16.msra.mxu0 0
      %1835 = vmatprep.subr.bf16.mxu0 0
      %1836 = vmatpush1.bf16.msra.mxu0 0
      %1837 = vmatprep.subr.bf16.mxu0 0
      %1838 = vmatpush1.bf16.msra.mxu0 0
      %1839 = vmatprep.subr.bf16.mxu0 0
      %1840 = vmatpush1.bf16.msra.mxu0 0
      %1841 = vmatprep.subr.bf16.mxu0 0
      %1842 = vmatpush1.bf16.msra.mxu0 0
      %1843 = vmatprep.subr.bf16.mxu0 0
      %1844 = vmatpush1.bf16.msra.mxu0 0
      %1845 = vmatprep.subr.bf16.mxu0 0
      %1846 = vmatpush1.bf16.msra.mxu0 0
      %1847 = vmatprep.subr.bf16.mxu0 0
      %1848 = vmatpush1.bf16.msra.mxu0 0
      %1849 = vmatprep.subr.bf16.mxu0 0
      %1850 = vmatpush1.bf16.msra.mxu0 0
      %1851 = vmatprep.subr.bf16.mxu0 0
      %1852 = vmatpush1.bf16.msra.mxu0 0
      %1853 = vmatprep.subr.bf16.mxu0 0
      %1854 = vmatpush1.bf16.msra.mxu0 0
      %1855 = vmatprep.subr.bf16.mxu0 0
      %1856 = vmatpush1.bf16.msra.mxu0 0
      %1857 = vmatprep.subr.bf16.mxu0 0
      %1858 = vmatpush1.bf16.msra.mxu0 0
      %1859 = vmatprep.subr.bf16.mxu0 0
      %1860 = vmatpush1.bf16.msra.mxu0 0
      %1861 = vmatprep.mubr.bf16.mxu0 0
      %1862 = vmatmul.mubr.bf16.gmra.mrb[0].mxu0 %v1827
      %v1863 = vpop.f32.mrb[0].mxu0
      %v1864 = vadd.f32 0.0, %v1863
      %v1865 = vpop.f32.mrb[0].mxu0
      %v1866 = vpop.f32.mrb[0].mxu0
      %v1867 = vadd.f32 0.0, %v1866
      %v1868 = vpop.f32.mrb[0].mxu0
      %1869 = vdwg.mxu0
      %1872 = vrot.lane.b32.xlu0 %v1864, 32
      %v1873 = vpop.permute.xlu0 %1872
      %1874 = vrot.lane.b32.xlu0 %v1867, 32
      %v1875 = vpop.permute.xlu0 %1874
      %v1878 = vsel %vm746, %v1482, %v1873
      %v1879 = vsel %vm746, %v1483, %v1875
      %v1880 = vpack.c.bf16 %v1879, %v1878
      %v1882 = vsel %vm830, %v1880, 0
      %1884 = vmatprep.subr.bf16.mxu0 0
      %1885 = vmatpush1.bf16.msra.mxu0 %v953
      %1886 = vmatprep.subr.bf16.mxu0 0
      %1887 = vmatpush1.bf16.msra.mxu0 %v954
      %1888 = vmatprep.subr.bf16.mxu0 0
      %1889 = vmatpush1.bf16.msra.mxu0 %v955
      %1890 = vmatprep.subr.bf16.mxu0 0
      %1891 = vmatpush1.bf16.msra.mxu0 %v956
      %1892 = vmatprep.subr.bf16.mxu0 0
      %1893 = vmatpush1.bf16.msra.mxu0 0
      %1894 = vmatprep.subr.bf16.mxu0 0
      %1895 = vmatpush1.bf16.msra.mxu0 0
      %1896 = vmatprep.subr.bf16.mxu0 0
      %1897 = vmatpush1.bf16.msra.mxu0 0
      %1898 = vmatprep.subr.bf16.mxu0 0
      %1899 = vmatpush1.bf16.msra.mxu0 0
      %1900 = vmatprep.subr.bf16.mxu0 0
      %1901 = vmatpush1.bf16.msra.mxu0 0
      %1902 = vmatprep.subr.bf16.mxu0 0
      %1903 = vmatpush1.bf16.msra.mxu0 0
      %1904 = vmatprep.subr.bf16.mxu0 0
      %1905 = vmatpush1.bf16.msra.mxu0 0
      %1906 = vmatprep.subr.bf16.mxu0 0
      %1907 = vmatpush1.bf16.msra.mxu0 0
      %1908 = vmatprep.subr.bf16.mxu0 0
      %1909 = vmatpush1.bf16.msra.mxu0 0
      %1910 = vmatprep.subr.bf16.mxu0 0
      %1911 = vmatpush1.bf16.msra.mxu0 0
      %1912 = vmatprep.subr.bf16.mxu0 0
      %1913 = vmatpush1.bf16.msra.mxu0 0
      %1914 = vmatprep.subr.bf16.mxu0 0
      %1915 = vmatpush1.bf16.msra.mxu0 0
      %1916 = vmatprep.mubr.bf16.mxu0 0
      %1917 = vmatmul.mubr.bf16.gmra.mrb[0].mxu0 %v1882
      %v1918 = vpop.f32.mrb[0].mxu0
      %v1919 = vadd.f32 %v687, %v1918
      %v1920 = vpop.f32.mrb[0].mxu0
      %v1921 = vpop.f32.mrb[0].mxu0
      %v1922 = vadd.f32 %v687, %v1921
      %v1923 = vpop.f32.mrb[0].mxu0
      %1924 = vdwg.mxu0
      %v1925 = vmax.f32 %v1919, 0.0
      %v1926 = vmax.f32 %v1922, 0.0
      %v1927 = vpack.c.bf16 %v1926, %v1925
      %v1929 = vsel %vm746, %v1927, 0
      %1931 = vmatprep.subr.bf16.mxu0 0
      %1932 = vmatpush1.bf16.msra.mxu0 %v1016
      %1933 = vmatprep.subr.bf16.mxu0 0
      %1934 = vmatpush1.bf16.msra.mxu0 %v1017
      %1935 = vmatprep.subr.bf16.mxu0 0
      %1936 = vmatpush1.bf16.msra.mxu0 0
      %1937 = vmatprep.subr.bf16.mxu0 0
      %1938 = vmatpush1.bf16.msra.mxu0 0
      %1939 = vmatprep.subr.bf16.mxu0 0
      %1940 = vmatpush1.bf16.msra.mxu0 0
      %1941 = vmatprep.subr.bf16.mxu0 0
      %1942 = vmatpush1.bf16.msra.mxu0 0
      %1943 = vmatprep.subr.bf16.mxu0 0
      %1944 = vmatpush1.bf16.msra.mxu0 0
      %1945 = vmatprep.subr.bf16.mxu0 0
      %1946 = vmatpush1.bf16.msra.mxu0 0
      %1947 = vmatprep.subr.bf16.mxu0 0
      %1948 = vmatpush1.bf16.msra.mxu0 0
      %1949 = vmatprep.subr.bf16.mxu0 0
      %1950 = vmatpush1.bf16.msra.mxu0 0
      %1951 = vmatprep.subr.bf16.mxu0 0
      %1952 = vmatpush1.bf16.msra.mxu0 0
      %1953 = vmatprep.subr.bf16.mxu0 0
      %1954 = vmatpush1.bf16.msra.mxu0 0
      %1955 = vmatprep.subr.bf16.mxu0 0
      %1956 = vmatpush1.bf16.msra.mxu0 0
      %1957 = vmatprep.subr.bf16.mxu0 0
      %1958 = vmatpush1.bf16.msra.mxu0 0
      %1959 = vmatprep.subr.bf16.mxu0 0
      %1960 = vmatpush1.bf16.msra.mxu0 0
      %1961 = vmatprep.subr.bf16.mxu0 0
      %1962 = vmatpush1.bf16.msra.mxu0 0
      %1963 = vmatprep.mubr.bf16.mxu0 0
      %1964 = vmatmul.mubr.bf16.gmra.mrb[0].mxu0 %v1929
      %v1965 = vpop.f32.mrb[0].mxu0
      %v1966 = vadd.f32 %v694, %v1965
      %v1967 = vpop.f32.mrb[0].mxu0
      %v1968 = vpop.f32.mrb[0].mxu0
      %v1969 = vpop.f32.mrb[0].mxu0
      %1970 = vdwg.mxu0
      %v1972 = vrot.slane %v1927, 4
      %v1974 = vsel %vm746, %v1972, 0
      %1976 = vmatprep.subr.bf16.mxu0 0
      %1977 = vmatpush1.bf16.msra.mxu0 %v1073
      %1978 = vmatprep.subr.bf16.mxu0 0
      %1979 = vmatpush1.bf16.msra.mxu0 %v1074
      %1980 = vmatprep.subr.bf16.mxu0 0
      %1981 = vmatpush1.bf16.msra.mxu0 0
      %1982 = vmatprep.subr.bf16.mxu0 0
      %1983 = vmatpush1.bf16.msra.mxu0 0
      %1984 = vmatprep.subr.bf16.mxu0 0
      %1985 = vmatpush1.bf16.msra.mxu0 0
      %1986 = vmatprep.subr.bf16.mxu0 0
      %1987 = vmatpush1.bf16.msra.mxu0 0
      %1988 = vmatprep.subr.bf16.mxu0 0
      %1989 = vmatpush1.bf16.msra.mxu0 0
      %1990 = vmatprep.subr.bf16.mxu0 0
      %1991 = vmatpush1.bf16.msra.mxu0 0
      %1992 = vmatprep.subr.bf16.mxu0 0
      %1993 = vmatpush1.bf16.msra.mxu0 0
      %1994 = vmatprep.subr.bf16.mxu0 0
      %1995 = vmatpush1.bf16.msra.mxu0 0
      %1996 = vmatprep.subr.bf16.mxu0 0
      %1997 = vmatpush1.bf16.msra.mxu0 0
      %1998 = vmatprep.subr.bf16.mxu0 0
      %1999 = vmatpush1.bf16.msra.mxu0 0
      %2000 = vmatprep.subr.bf16.mxu0 0
      %2001 = vmatpush1.bf16.msra.mxu0 0
      %2002 = vmatprep.subr.bf16.mxu0 0
      %2003 = vmatpush1.bf16.msra.mxu0 0
      %2004 = vmatprep.subr.bf16.mxu0 0
      %2005 = vmatpush1.bf16.msra.mxu0 0
      %2006 = vmatprep.subr.bf16.mxu0 0
      %2007 = vmatpush1.bf16.msra.mxu0 0
      %2008 = vmatprep.mubr.bf16.mxu0 0
      %2009 = vmatmul.mubr.bf16.gmra.mrb[0].mxu0 %v1974
      %v2010 = vpop.f32.mrb[0].mxu0
      %v2011 = vadd.f32 %v701, %v2010
      %v2012 = vpop.f32.mrb[0].mxu0
      %v2013 = vpop.f32.mrb[0].mxu0
      %v2014 = vpop.f32.mrb[0].mxu0
      %2015 = vdwg.mxu0
      %v2016 = vpack.c.bf16 %v1966, %v1966
      %v2018 = vsel %vm746, %v2016, 0
      %2020 = vmatprep.subr.bf16.mxu0 0
      %2021 = vmatpush1.bf16.xpose.msra.mxu0 %v1125
      %2022 = vmatprep.subr.bf16.mxu0 0
      %2023 = vmatpush1.bf16.xpose.msra.mxu0 0
      %2024 = vmatprep.subr.bf16.mxu0 0
      %2025 = vmatpush1.bf16.xpose.msra.mxu0 0
      %2026 = vmatprep.subr.bf16.mxu0 0
      %2027 = vmatpush1.bf16.xpose.msra.mxu0 0
      %2028 = vmatprep.subr.bf16.mxu0 0
      %2029 = vmatpush1.bf16.xpose.msra.mxu0 0
      %2030 = vmatprep.subr.bf16.mxu0 0
      %2031 = vmatpush1.bf16.xpose.msra.mxu0 0
      %2032 = vmatprep.subr.bf16.mxu0 0
      %2033 = vmatpush1.bf16.xpose.msra.mxu0 0
      %2034 = vmatprep.subr.bf16.mxu0 0
      %2035 = vmatpush1.bf16.xpose.msra.mxu0 0
      %2036 = vmatprep.subr.bf16.mxu0 0
      %2037 = vmatpush1.bf16.xpose.msra.mxu0 0
      %2038 = vmatprep.subr.bf16.mxu0 0
      %2039 = vmatpush1.bf16.xpose.msra.mxu0 0
      %2040 = vmatprep.subr.bf16.mxu0 0
      %2041 = vmatpush1.bf16.xpose.msra.mxu0 0
      %2042 = vmatprep.subr.bf16.mxu0 0
      %2043 = vmatpush1.bf16.xpose.msra.mxu0 0
      %2044 = vmatprep.subr.bf16.mxu0 0
      %2045 = vmatpush1.bf16.xpose.msra.mxu0 0
      %2046 = vmatprep.subr.bf16.mxu0 0
      %2047 = vmatpush1.bf16.xpose.msra.mxu0 0
      %2048 = vmatprep.subr.bf16.mxu0 0
      %2049 = vmatpush1.bf16.xpose.msra.mxu0 0
      %2050 = vmatprep.subr.bf16.mxu0 0
      %2051 = vmatpush1.bf16.xpose.msra.mxu0 0
      %2052 = vmatprep.mubr.bf16.mxu0 0
      %2053 = vmatmul.mubr.bf16.gmra.mrb[0].mxu0 %v2018
      %v2054 = vpop.f32.mrb[0].mxu0
      %v2055 = vadd.f32 0.0, %v2054
      %v2056 = vpop.f32.mrb[0].mxu0
      %v2057 = vpop.f32.mrb[0].mxu0
      %v2058 = vpop.f32.mrb[0].mxu0
      %2059 = vdwg.mxu0
      %v2060 = vmul.f32 %v2055, 0.17677669
      %v2061 = vpack.c.bf16 %v2011, %v2011
      %v2063 = vsel %vm746, %v2061, 0
      %2065 = vmatprep.subr.bf16.mxu0 0
      %2066 = vmatpush1.bf16.xpose.msra.mxu0 %v1176
      %2067 = vmatprep.subr.bf16.mxu0 0
      %2068 = vmatpush1.bf16.xpose.msra.mxu0 0
      %2069 = vmatprep.subr.bf16.mxu0 0
      %2070 = vmatpush1.bf16.xpose.msra.mxu0 0
      %2071 = vmatprep.subr.bf16.mxu0 0
      %2072 = vmatpush1.bf16.xpose.msra.mxu0 0
      %2073 = vmatprep.subr.bf16.mxu0 0
      %2074 = vmatpush1.bf16.xpose.msra.mxu0 0
      %2075 = vmatprep.subr.bf16.mxu0 0
      %2076 = vmatpush1.bf16.xpose.msra.mxu0 0
      %2077 = vmatprep.subr.bf16.mxu0 0
      %2078 = vmatpush1.bf16.xpose.msra.mxu0 0
      %2079 = vmatprep.subr.bf16.mxu0 0
      %2080 = vmatpush1.bf16.xpose.msra.mxu0 0
      %2081 = vmatprep.subr.bf16.mxu0 0
      %2082 = vmatpush1.bf16.xpose.msra.mxu0 0
      %2083 = vmatprep.subr.bf16.mxu0 0
      %2084 = vmatpush1.bf16.xpose.msra.mxu0 0
      %2085 = vmatprep.subr.bf16.mxu0 0
      %2086 = vmatpush1.bf16.xpose.msra.mxu0 0
      %2087 = vmatprep.subr.bf16.mxu0 0
      %2088 = vmatpush1.bf16.xpose.msra.mxu0 0
      %2089 = vmatprep.subr.bf16.mxu0 0
      %2090 = vmatpush1.bf16.xpose.msra.mxu0 0
      %2091 = vmatprep.subr.bf16.mxu0 0
      %2092 = vmatpush1.bf16.xpose.msra.mxu0 0
      %2093 = vmatprep.subr.bf16.mxu0 0
      %2094 = vmatpush1.bf16.xpose.msra.mxu0 0
      %2095 = vmatprep.subr.bf16.mxu0 0
      %2096 = vmatpush1.bf16.xpose.msra.mxu0 0
      %2097 = vmatprep.mubr.bf16.mxu0 0
      %2098 = vmatmul.mubr.bf16.gmra.mrb[0].mxu0 %v2063
      %v2099 = vpop.f32.mrb[0].mxu0
      %v2100 = vadd.f32 0.0, %v2099
      %v2101 = vpop.f32.mrb[0].mxu0
      %v2102 = vpop.f32.mrb[0].mxu0
      %v2103 = vpop.f32.mrb[0].mxu0
      %2104 = vdwg.mxu0
      %v2105 = vmul.f32 %v2100, 0.17677669
      %vm2106 = vcmp.gt.f32.partialorder %v1824, 0.0
      %v2107 = vsel %vm2106, %v2060, -1e+18
      %v2108 = vsel %vm2106, %v2105, -1e+18
      %v2109 = vsel %vm715, %v2107, -inf
      %2110 = vmax.xlane.f32.xlu0 %v2109
      %v2111 = vpop.xlane.xlu0 %2110
      %v2112 = vsub.f32 %v2107, %v2111
      %v2113 = vmul.f32 %v2112, 1.442695
      %v2114 = vpow.pop %v2113
      %v2115 = vsel %vm715, %v2114, 0.0
      %2116 = vadd.xlane.f32.xlu0 %v2115
      %v2117 = vpop.xlane.xlu0 %2116
      %v2118 = vrcp.pop %v2117
      %v2119 = vmul.f32 %v2114, %v2118
      %v2120 = vsel %vm715, %v2108, -inf
      %2121 = vmax.xlane.f32.xlu0 %v2120
      %v2122 = vpop.xlane.xlu0 %2121
      %v2123 = vsub.f32 %v2108, %v2122
      %v2124 = vmul.f32 %v2123, 1.442695
      %v2125 = vpow.pop %v2124
      %v2126 = vsel %vm715, %v2125, 0.0
      %2127 = vadd.xlane.f32.xlu0 %v2126
      %v2128 = vpop.xlane.xlu0 %2127
      %v2129 = vrcp.pop %v2128
      %v2130 = vmul.f32 %v2125, %v2129
      %v2132 = vcombine.high %v2119, %v2119
      %v2134 = vunpack.c.l.s4 1966171168
      %v2135 = vunpack.c.0.s8 %v2134
      %v2136 = vlaneseq
      %v2137 = vshrl.u32 %v2136, 7
      %v2138 = vsub.s32 %v2135, %v2137
      %v2139 = vrot.slane %v2119, %v2138
      %v2141 = vunpack.c.l.s4 1966171168
      %v2142 = vunpack.c.0.s8 %v2141
      %v2143 = vlaneseq
      %v2144 = vshrl.u32 %v2143, 7
      %v2145 = vsub.s32 %v2142, %v2144
      %v2146 = vrot.slane %v2132, %v2145
      %v2147 = vcombine.high %v2139, %v2139
      %v2148 = vcombine.high %v2146, %v2146
      %v2150 = vunpack.c.l.s4 1966171168
      %v2151 = vunpack.c.0.s8 %v2150
      %v2152 = vlaneseq
      %v2153 = vshrl.u32 %v2152, 7
      %v2154 = vsub.s32 %v2151, %v2153
      %v2155 = vrot.slane %v2139, %v2154
      %v2157 = vunpack.c.l.s4 1966171168
      %v2158 = vunpack.c.0.s8 %v2157
      %v2159 = vlaneseq
      %v2160 = vshrl.u32 %v2159, 7
      %v2161 = vsub.s32 %v2158, %v2160
      %v2162 = vrot.slane %v2146, %v2161
      %v2164 = vunpack.c.l.s4 1966171168
      %v2165 = vunpack.c.0.s8 %v2164
      %v2166 = vlaneseq
      %v2167 = vshrl.u32 %v2166, 7
      %v2168 = vsub.s32 %v2165, %v2167
      %v2169 = vrot.slane %v2147, %v2168
      %v2171 = vunpack.c.l.s4 1966171168
      %v2172 = vunpack.c.0.s8 %v2171
      %v2173 = vlaneseq
      %v2174 = vshrl.u32 %v2173, 7
      %v2175 = vsub.s32 %v2172, %v2174
      %v2176 = vrot.slane %v2148, %v2175
      %v2177 = vcombine.high %v2155, %v2155
      %v2178 = vcombine.high %v2162, %v2162
      %v2179 = vcombine.high %v2169, %v2169
      %v2180 = vcombine.high %v2176, %v2176
      %2189 = vst.msk [vmem:[%s638 + $0x2] sm:$0x1] %vm1302, %v2155
      %2190 = vst.msk [vmem:[%s638 + $0x6] sm:$0x1] %vm1302, %v2169
      %2191 = vst.msk [vmem:[%s638 + $0xa] sm:$0x1] %vm1302, %v2177
      %2192 = vst.msk [vmem:[%s638 + $0xe] sm:$0x1] %vm1302, %v2179
      %2193 = vst.msk [vmem:[%s638 + $0x12] sm:$0x1] %vm1302, %v2162
      %2194 = vst.msk [vmem:[%s638 + $0x16] sm:$0x1] %vm1302, %v2176
      %2195 = vst.msk [vmem:[%s638 + $0x1a] sm:$0x1] %vm1302, %v2178
      %2196 = vst.msk [vmem:[%s638 + $0x1e] sm:$0x1] %vm1302, %v2180
      %v2198 = vcombine.high %v2130, %v2130
      %v2200 = vunpack.c.l.s4 1966171168
      %v2201 = vunpack.c.0.s8 %v2200
      %v2202 = vlaneseq
      %v2203 = vshrl.u32 %v2202, 7
      %v2204 = vsub.s32 %v2201, %v2203
      %v2205 = vrot.slane %v2130, %v2204
      %v2207 = vunpack.c.l.s4 1966171168
      %v2208 = vunpack.c.0.s8 %v2207
      %v2209 = vlaneseq
      %v2210 = vshrl.u32 %v2209, 7
      %v2211 = vsub.s32 %v2208, %v2210
      %v2212 = vrot.slane %v2198, %v2211
      %v2213 = vcombine.high %v2205, %v2205
      %v2214 = vcombine.high %v2212, %v2212
      %v2216 = vunpack.c.l.s4 1966171168
      %v2217 = vunpack.c.0.s8 %v2216
      %v2218 = vlaneseq
      %v2219 = vshrl.u32 %v2218, 7
      %v2220 = vsub.s32 %v2217, %v2219
      %v2221 = vrot.slane %v2205, %v2220
      %v2223 = vunpack.c.l.s4 1966171168
      %v2224 = vunpack.c.0.s8 %v2223
      %v2225 = vlaneseq
      %v2226 = vshrl.u32 %v2225, 7
      %v2227 = vsub.s32 %v2224, %v2226
      %v2228 = vrot.slane %v2212, %v2227
      %v2230 = vunpack.c.l.s4 1966171168
      %v2231 = vunpack.c.0.s8 %v2230
      %v2232 = vlaneseq
      %v2233 = vshrl.u32 %v2232, 7
      %v2234 = vsub.s32 %v2231, %v2233
      %v2235 = vrot.slane %v2213, %v2234
      %v2237 = vunpack.c.l.s4 1966171168
      %v2238 = vunpack.c.0.s8 %v2237
      %v2239 = vlaneseq
      %v2240 = vshrl.u32 %v2239, 7
      %v2241 = vsub.s32 %v2238, %v2240
      %v2242 = vrot.slane %v2214, %v2241
      %v2243 = vcombine.high %v2221, %v2221
      %v2244 = vcombine.high %v2228, %v2228
      %v2245 = vcombine.high %v2235, %v2235
      %v2246 = vcombine.high %v2242, %v2242
      %2255 = vst.msk [vmem:[%s643 + $0x2] sm:$0x1] %vm1302, %v2221
      %2256 = vst.msk [vmem:[%s643 + $0x6] sm:$0x1] %vm1302, %v2235
      %2257 = vst.msk [vmem:[%s643 + $0xa] sm:$0x1] %vm1302, %v2243
      %2258 = vst.msk [vmem:[%s643 + $0xe] sm:$0x1] %vm1302, %v2245
      %2259 = vst.msk [vmem:[%s643 + $0x12] sm:$0x1] %vm1302, %v2228
      %2260 = vst.msk [vmem:[%s643 + $0x16] sm:$0x1] %vm1302, %v2242
      %2261 = vst.msk [vmem:[%s643 + $0x1a] sm:$0x1] %vm1302, %v2244
      %2262 = vst.msk [vmem:[%s643 + $0x1e] sm:$0x1] %vm1302, %v2246
      %p2263 = scmp.lt.s32.totalorder %s29, 1
      %s2264 = scalar_select %p2263, %s29, 1
      %s2265 = smul.addr %s2264, 8
      %s2266 = smul.addr %s2265, 4
      %s2267 = scalar_lea.vmem %s16, %s2266
      %p2268 = scmp.lt.s32.totalorder %s29, 1
      %s2269 = scalar_select %p2268, %s29, 1
      %s2270 = smul.addr %s2269, 8
      %s2271 = smul.addr %s2270, 4
      %s2272 = scalar_lea.vmem %s17, %s2271
      // Predicated region
      $region85: #{tpu_custom_call.1} parent=83 // pred_check
        %p2273 = pneg %p413
      $region86: #{tpu_custom_call.1} parent=83 // pred_check_branch
        %2275 = sbr.rel (%p2273) target = $region88
      $region87: #{tpu_custom_call.1} parent=83 // pred_region
        _
      $region88: #{tpu_custom_call.1} parent=83 // pred_fallthru
        _
      // Predicated region
      $region89: #{tpu_custom_call.1} parent=83 // pred_check
        %p2276 = pneg %p439
      $region90: #{tpu_custom_call.1} parent=83 // pred_check_branch
        %2278 = sbr.rel (%p2276) target = $region92
      $region91: #{tpu_custom_call.1} parent=83 // pred_region
        _
      $region92: #{tpu_custom_call.1} parent=83 // pred_fallthru
        _
    $region84: #{tpu_custom_call.1} parent=5 // pred_fallthru
      _
    %p2279 = scmp.le.s32.totalorder 2, %s24
    // Predicated region
    $region93: #{tpu_custom_call.1} parent=5 // pred_check
      %p2280 = pneg %p2279
    $region94: #{tpu_custom_call.1} parent=5 // pred_check_branch
      %2282 = sbr.rel (%p2280) target = $region96
    $region95: #{tpu_custom_call.1} parent=5 // pred_region
      %s2283 = ssub.s32 %s24, 2
      // Predicated region
      $region97: #{tpu_custom_call.1} parent=95 // pred_check
        %p2284 = pneg %p419
      $region98: #{tpu_custom_call.1} parent=95 // pred_check_branch
        %2286 = sbr.rel (%p2284) target = $region100
      $region99: #{tpu_custom_call.1} parent=95 // pred_region
        %p2287 = scmp.lt.s32.totalorder %s30, 1
        %s2288 = scalar_select %p2287, %s30, 1
        %s2289 = smul.addr %s2288, 8
        %s2290 = smul.addr %s2289, 4
        %s2291 = scalar_lea.vmem %s16, %s2290
      $region100: #{tpu_custom_call.1} parent=95 // pred_fallthru
        _
      // Predicated region
      $region101: #{tpu_custom_call.1} parent=95 // pred_check
        %p2292 = pneg %p445
      $region102: #{tpu_custom_call.1} parent=95 // pred_check_branch
        %2294 = sbr.rel (%p2292) target = $region104
      $region103: #{tpu_custom_call.1} parent=95 // pred_region
        %p2295 = scmp.lt.s32.totalorder %s30, 1
        %s2296 = scalar_select %p2295, %s30, 1
        %s2297 = smul.addr %s2296, 8
        %s2298 = smul.addr %s2297, 4
        %s2299 = scalar_lea.vmem %s17, %s2298
      $region104: #{tpu_custom_call.1} parent=95 // pred_fallthru
        _
    $region96: #{tpu_custom_call.1} parent=5 // pred_fallthru
      _
  $region6: #{tpu_custom_call.1} parent=0 // loop_footer
    %s28 = sadd.s32 1, %s24
  $region7: #{tpu_custom_call.1} parent=0 // loop_footer_branch
    %23 = sbr.rel target = $region3
  $region8: #{tpu_custom_call.1} parent=0 // loop_exit
    _

</llo_original>
